<compile_context>
chip_gen: v5e
topology: v5e:2x2
jax: 0.10.0
libtpu: 0.0.40
codegen_flags: <defaults>
</compile_context>

<pallas_src>
import functools

import jax
import jax.numpy as jnp
from jax.experimental import pallas as pl
from jax.experimental.pallas import tpu as pltpu

# ----- model hyperparameters (small, consistent with the module) -----
B = 2            # batch
N = 8            # sequence length
DIM = 32         # embedding dim
NUM_HEADS = 4
HEAD_DIM = DIM // NUM_HEADS
MLP_RATIO = 4.0
MLP_HIDDEN = int(DIM * MLP_RATIO)
EPS = 1e-5
SCALE = HEAD_DIM ** (-0.5)
_INV_SQRT2 = 0.7071067811865476
VEC_W = max(128, MLP_HIDDEN)     # lane width of the packed per-channel-vector tile


def _layernorm(x, w, b):
    mu = jnp.mean(x, axis=-1, keepdims=True)
    xc = x - mu
    var = jnp.mean(xc * xc, axis=-1, keepdims=True)
    return xc * jax.lax.rsqrt(var + EPS) * w + b


def encoder_kernel(bs, x_ref, vecs_ref, w_attn_ref, w1_ref, w2_ref,
                   out_ref, k_ref, v_ref):
    # x_ref: (bs*N, DIM) activation slab for this grid step (already flattened).
    x = x_ref[...]

    # Packed per-channel vectors: one (8, VEC_W) tile, sliced here.
    ln1w = vecs_ref[0:1, 0:DIM]
    ln1b = vecs_ref[1:2, 0:DIM]
    bproj = vecs_ref[2:3, 0:DIM]
    ln2w = vecs_ref[3:4, 0:DIM]
    ln2b = vecs_ref[4:5, 0:DIM]
    b2 = vecs_ref[5:6, 0:DIM]
    b1 = vecs_ref[6:7, 0:MLP_HIDDEN]

    # ---- LayerNorm 1 ----
    h = _layernorm(x, ln1w, ln1b)

    # ---- lane-aligned q/k/v: three (DIM, DIM) dots (no 3*DIM result slicing) ----
    q = jnp.dot(h, w_attn_ref[0:DIM, :], preferred_element_type=jnp.float32)
    k = jnp.dot(h, w_attn_ref[DIM:2 * DIM, :], preferred_element_type=jnp.float32)
    v = jnp.dot(h, w_attn_ref[2 * DIM:3 * DIM, :], preferred_element_type=jnp.float32)

    # ---- lane-dense k/v stores: whole (rows, DIM) slabs, no per-head masked stores.
    #      The (B, H, N, head_dim) permute is done in the wrapper. ----
    k_ref[...] = k
    v_ref[...] = v

    # ---- attention per (batch, head); output projection folded into the loop ----
    batch_blocks = []
    for b in range(bs):
        rows = slice(b * N, (b + 1) * N)
        acc = None
        for hh in range(NUM_HEADS):
            cols = slice(hh * HEAD_DIM, (hh + 1) * HEAD_DIM)
            qh = q[rows, cols]                                   # (N, hd)
            kh = k[rows, cols]
            vh = v[rows, cols]
            # transpose-free q @ k^T (contract last dims; MXU consumes it directly)
            s = jax.lax.dot_general(
                qh, kh, dimension_numbers=(((1,), (1,)), ((), ())),
                preferred_element_type=jnp.float32) * SCALE      # (N, N)
            s = s - jnp.max(s, axis=-1, keepdims=True)
            p = jnp.exp(s)
            p = p * pl.reciprocal(jnp.sum(p, axis=-1, keepdims=True), approx=True)
            oh = jnp.dot(p, vh, preferred_element_type=jnp.float32)   # (N, hd)
            # project this head against its row-slice of Wproj^T and accumulate
            wp = w_attn_ref[3 * DIM + hh * HEAD_DIM:3 * DIM + (hh + 1) * HEAD_DIM, :]
            c = jnp.dot(oh, wp, preferred_element_type=jnp.float32)   # (N, DIM)
            acc = c if acc is None else acc + c
        batch_blocks.append(acc)
    x_attn = batch_blocks[0] if bs == 1 else jnp.concatenate(batch_blocks, axis=0)
    x_attn = x_attn + bproj

    # ---- module quirk: x = x + drop_path(x) applied to the attention output ----
    x1 = x_attn + x_attn

    # ---- LayerNorm 2 + MLP (Linear -> exact erf GELU -> Linear) ----
    h2 = _layernorm(x1, ln2w, ln2b)
    z = jnp.dot(h2, w1_ref[...], preferred_element_type=jnp.float32) + b1
    z = 0.5 * z * (1.0 + jax.lax.erf(z * _INV_SQRT2))     # nn.GELU default (exact)
    m = jnp.dot(z, w2_ref[...], preferred_element_type=jnp.float32) + b2

    out_ref[...] = x1 + m


def _batches_per_step(total_batch):
    """v7x has two TensorCores: keep grid=(B,) parallel so batches shard across
    cores. v5e/v6e have one TC: fold the batch into a single grid step to avoid
    per-step pipeline overhead."""
    try:
        kind = jax.devices()[0].device_kind.lower()
    except Exception:
        kind = ""
    dual_core = "7" in kind            # e.g. "tpu7x" / "tpu v7x"
    return 1 if dual_core else total_batch


def transformer_encoder_layer(x, params):
    (ln1w, ln1b, wqkv, wproj, bproj, ln2w, ln2b, w1, b1, w2, b2) = params
    assert x.shape == (B, N, DIM)

    # ---- layout plumbing (all outside the kernel) ----
    # torch Linear weight is (out, in); the kernel wants (in, out) row-major slabs.
    wq_t = wqkv[0 * DIM:1 * DIM, :].T
    wk_t = wqkv[1 * DIM:2 * DIM, :].T
    wv_t = wqkv[2 * DIM:3 * DIM, :].T
    w_attn = jnp.concatenate([wq_t, wk_t, wv_t, wproj.T], axis=0)   # (4*DIM, DIM)
    w1_t = w1.T                                                     # (DIM, MLP_HIDDEN)
    w2_t = w2.T                                                     # (MLP_HIDDEN, DIM)

    # pack every small per-channel vector into a single (8, VEC_W) tile
    def _row(vec):
        vec = vec.reshape(1, -1).astype(jnp.float32)
        return jnp.pad(vec, ((0, 0), (0, VEC_W - vec.shape[1])))

    vecs = jnp.concatenate(
        [_row(ln1w), _row(ln1b), _row(bproj), _row(ln2w), _row(ln2b), _row(b2),
         _row(b1), jnp.zeros((1, VEC_W), jnp.float32)], axis=0)     # (8, VEC_W)

    x2 = x.reshape(B * N, DIM)          # flattened activation slab

    bs = _batches_per_step(B)           # batches handled per grid step
    rows = bs * N
    n_steps = B // bs

    grid_spec = pltpu.PrefetchScalarGridSpec(
        num_scalar_prefetch=0,
        grid=(n_steps,),
        in_specs=[
            pl.BlockSpec((rows, DIM), lambda i: (i, 0)),            # x slab
            pl.BlockSpec((8, VEC_W), lambda i: (0, 0)),             # packed scale/bias vecs
            pl.BlockSpec((4 * DIM, DIM), lambda i: (0, 0)),         # Wq|Wk|Wv|Wproj (in,out)
            pl.BlockSpec((DIM, MLP_HIDDEN), lambda i: (0, 0)),      # W1^T
            pl.BlockSpec((MLP_HIDDEN, DIM), lambda i: (0, 0)),      # W2^T
        ],
        out_specs=[
            pl.BlockSpec((rows, DIM), lambda i: (i, 0)),            # out slab
            pl.BlockSpec((rows, DIM), lambda i: (i, 0)),            # k slab (lane-dense)
            pl.BlockSpec((rows, DIM), lambda i: (i, 0)),            # v slab (lane-dense)
        ],
    )

    out2, k2, v2 = pl.pallas_call(
        functools.partial(encoder_kernel, bs),
        out_shape=(
            jax.ShapeDtypeStruct((B * N, DIM), jnp.float32),
            jax.ShapeDtypeStruct((B * N, DIM), jnp.float32),
            jax.ShapeDtypeStruct((B * N, DIM), jnp.float32),
        ),
        grid_spec=grid_spec,
        compiler_params=pltpu.CompilerParams(
            dimension_semantics=("parallel",)),
    )(x2, vecs, w_attn, w1_t, w2_t)

    out = out2.reshape(B, N, DIM)
    # head split / permute to the PyTorch (B, H, N, head_dim) layout, outside the kernel
    k = k2.reshape(B, N, NUM_HEADS, HEAD_DIM).transpose(0, 2, 1, 3)
    v = v2.reshape(B, N, NUM_HEADS, HEAD_DIM).transpose(0, 2, 1, 3)
    return out, k, v


# ---------------- pure-JAX reference (mirrors the PyTorch forward) ----------------
def ref_forward(x, params):
    (ln1w, ln1b, wqkv, wproj, bproj, ln2w, ln2b, w1, b1, w2, b2) = params

    def ln(t, w, b):
        mu = t.mean(-1, keepdims=True)
        var = ((t - mu) ** 2).mean(-1, keepdims=True)
        return (t - mu) / jnp.sqrt(var + EPS) * w + b

    h = ln(x, ln1w, ln1b)
    qkv = h @ wqkv.T                                             # (B, N, 3C)
    qkv = qkv.reshape(B, N, 3, NUM_HEADS, HEAD_DIM).transpose(2, 0, 3, 1, 4)
    q, k, v = qkv[0], qkv[1], qkv[2]                             # (B, H, N, hd)
    attn = jnp.einsum("bhqd,bhkd->bhqk", q, k) * SCALE
    attn = jax.nn.softmax(attn, axis=-1)
    o = jnp.einsum("bhqk,bhkd->bhqd", attn, v)
    o = o.transpose(0, 2, 1, 3).reshape(B, N, DIM)
    o = o @ wproj.T + bproj
    x1 = o + o
    h2 = ln(x1, ln2w, ln2b)
    z = h2 @ w1.T + b1
    z = 0.5 * z * (1.0 + jax.lax.erf(z * _INV_SQRT2))
    m = z @ w2.T + b2
    return x1 + m, k, v


def make_params(key):
    ks = jax.random.split(key, 11)
    f = jnp.float32
    ln1w = (1.0 + 0.1 * jax.random.normal(ks[0], (DIM,))).astype(f)
    ln1b = (0.1 * jax.random.normal(ks[1], (DIM,))).astype(f)
    wqkv = (0.05 * jax.random.normal(ks[2], (3 * DIM, DIM))).astype(f)   # torch (out, in)
    wproj = (0.05 * jax.random.normal(ks[3], (DIM, DIM))).astype(f)
    bproj = (0.05 * jax.random.normal(ks[4], (DIM,))).astype(f)
    ln2w = (1.0 + 0.1 * jax.random.normal(ks[5], (DIM,))).astype(f)
    ln2b = (0.1 * jax.random.normal(ks[6], (DIM,))).astype(f)
    w1 = (0.05 * jax.random.normal(ks[7], (MLP_HIDDEN, DIM))).astype(f)
    b1 = (0.05 * jax.random.normal(ks[8], (MLP_HIDDEN,))).astype(f)
    w2 = (0.05 * jax.random.normal(ks[9], (DIM, MLP_HIDDEN))).astype(f)
    b2 = (0.05 * jax.random.normal(ks[10], (DIM,))).astype(f)
    return (ln1w, ln1b, wqkv, wproj, bproj, ln2w, ln2b, w1, b1, w2, b2)


if __name__ == "__main__":
    key = jax.random.PRNGKey(0)
    kx, kp = jax.random.split(key)
    x = jax.random.normal(kx, (B, N, DIM), dtype=jnp.float32)
    params = make_params(kp)

    out, k, v = transformer_encoder_layer(x, params)
    jax.block_until_ready((out, k, v))

    ref_out, ref_k, ref_v = ref_forward(x, params)
    assert out.shape == (B, N, DIM)
    assert k.shape == (B, NUM_HEADS, N, HEAD_DIM) and v.shape == (B, NUM_HEADS, N, HEAD_DIM)
    # out tolerance is slightly looser to cover the EUP approx reciprocal in softmax.
    assert jnp.allclose(out, ref_out, atol=5e-3, rtol=5e-3), "output mismatch"
    assert jnp.allclose(k, ref_k, atol=2e-4, rtol=2e-4), "k mismatch"
    assert jnp.allclose(v, ref_v, atol=2e-4, rtol=2e-4), "v mismatch"

    print("KERNEL_OK")
</pallas_src>

<mosaic_0001>
module attributes {stable_mosaic.version = 11 : i64} {
  func.func @encoder_kernel(%arg0: i32, %arg1: memref<16x32xf32, #tpu.memory_space<vmem>>, %arg2: memref<8x128xf32, #tpu.memory_space<vmem>>, %arg3: memref<128x32xf32, #tpu.memory_space<vmem>>, %arg4: memref<32x128xf32, #tpu.memory_space<vmem>>, %arg5: memref<128x32xf32, #tpu.memory_space<vmem>>, %arg6: memref<16x32xf32, #tpu.memory_space<vmem>>, %arg7: memref<16x32xf32, #tpu.memory_space<vmem>>, %arg8: memref<16x32xf32, #tpu.memory_space<vmem>>) attributes {dimension_semantics = [#tpu.dimension_semantics<parallel>], iteration_bounds = array<i64: 1>, scalar_prefetch = 0 : i64, scratch_operands = 0 : i64, tpu.core_type = #tpu.core_type<tc>, window_params = [{transform_indices = @transform_0, window_bounds = array<i64: 16, 32>}, {pipeline_mode = #tpu.pipeline_mode<synchronous>, transform_indices = @transform_1, window_bounds = array<i64: 8, 128>}, {pipeline_mode = #tpu.pipeline_mode<synchronous>, transform_indices = @transform_2, window_bounds = array<i64: 128, 32>}, {pipeline_mode = #tpu.pipeline_mode<synchronous>, transform_indices = @transform_3, window_bounds = array<i64: 32, 128>}, {pipeline_mode = #tpu.pipeline_mode<synchronous>, transform_indices = @transform_4, window_bounds = array<i64: 128, 32>}, {transform_indices = @transform_5, window_bounds = array<i64: 16, 32>}, {transform_indices = @transform_6, window_bounds = array<i64: 16, 32>}, {transform_indices = @transform_7, window_bounds = array<i64: 16, 32>}]} {
    %c0 = arith.constant 0 : index
    %c0_0 = arith.constant 0 : index
    %0 = vector.load %arg1[%c0, %c0_0] : memref<16x32xf32, #tpu.memory_space<vmem>>, vector<16x32xf32>
    %c0_1 = arith.constant 0 : index
    %c0_2 = arith.constant 0 : index
    %1 = vector.load %arg2[%c0_1, %c0_2] : memref<8x128xf32, #tpu.memory_space<vmem>>, vector<1x32xf32>
    %c1 = arith.constant 1 : index
    %c0_3 = arith.constant 0 : index
    %2 = vector.load %arg2[%c1, %c0_3] : memref<8x128xf32, #tpu.memory_space<vmem>>, vector<1x32xf32>
    %c2 = arith.constant 2 : index
    %c0_4 = arith.constant 0 : index
    %3 = vector.load %arg2[%c2, %c0_4] : memref<8x128xf32, #tpu.memory_space<vmem>>, vector<1x32xf32>
    %c3 = arith.constant 3 : index
    %c0_5 = arith.constant 0 : index
    %4 = vector.load %arg2[%c3, %c0_5] : memref<8x128xf32, #tpu.memory_space<vmem>>, vector<1x32xf32>
    %c4 = arith.constant 4 : index
    %c0_6 = arith.constant 0 : index
    %5 = vector.load %arg2[%c4, %c0_6] : memref<8x128xf32, #tpu.memory_space<vmem>>, vector<1x32xf32>
    %c5 = arith.constant 5 : index
    %c0_7 = arith.constant 0 : index
    %6 = vector.load %arg2[%c5, %c0_7] : memref<8x128xf32, #tpu.memory_space<vmem>>, vector<1x32xf32>
    %c6 = arith.constant 6 : index
    %c0_8 = arith.constant 0 : index
    %7 = vector.load %arg2[%c6, %c0_8] : memref<8x128xf32, #tpu.memory_space<vmem>>, vector<1x128xf32>
    %cst = arith.constant dense<0.000000e+00> : vector<16xf32>
    %8 = vector.multi_reduction <add>, %0, %cst [1] : vector<16x32xf32> to vector<16xf32>
    %9 = vector.shape_cast %8 : vector<16xf32> to vector<16x1xf32>
    %cst_9 = arith.constant 3.200000e+01 : f32
    %10 = vector.broadcast %cst_9 : f32 to vector<16x1xf32>
    %11 = arith.divf %9, %10 : vector<16x1xf32>
    %12 = vector.broadcast %11 : vector<16x1xf32> to vector<16x32xf32>
    %13 = arith.subf %0, %12 : vector<16x32xf32>
    %14 = arith.mulf %13, %13 : vector<16x32xf32>
    %cst_10 = arith.constant dense<0.000000e+00> : vector<16xf32>
    %15 = vector.multi_reduction <add>, %14, %cst_10 [1] : vector<16x32xf32> to vector<16xf32>
    %16 = vector.shape_cast %15 : vector<16xf32> to vector<16x1xf32>
    %cst_11 = arith.constant 3.200000e+01 : f32
    %17 = vector.broadcast %cst_11 : f32 to vector<16x1xf32>
    %18 = arith.divf %16, %17 : vector<16x1xf32>
    %cst_12 = arith.constant 9.99999974E-6 : f32
    %19 = vector.broadcast %cst_12 : f32 to vector<16x1xf32>
    %20 = arith.addf %18, %19 : vector<16x1xf32>
    %21 = math.rsqrt %20 : vector<16x1xf32>
    %22 = vector.broadcast %21 : vector<16x1xf32> to vector<16x32xf32>
    %23 = arith.mulf %13, %22 : vector<16x32xf32>
    %24 = vector.broadcast %1 : vector<1x32xf32> to vector<16x32xf32>
    %25 = arith.mulf %23, %24 : vector<16x32xf32>
    %26 = vector.broadcast %2 : vector<1x32xf32> to vector<16x32xf32>
    %27 = arith.addf %25, %26 : vector<16x32xf32>
    %c0_13 = arith.constant 0 : index
    %c0_14 = arith.constant 0 : index
    %28 = vector.load %arg3[%c0_13, %c0_14] : memref<128x32xf32, #tpu.memory_space<vmem>>, vector<32x32xf32>
    %cst_15 = arith.constant dense<0.000000e+00> : vector<16x32xf32>
    %29 = tpu.matmul %27, %28, %cst_15 {dimension_numbers = #tpu.dot_dimension_numbers<[1], [0], [0], [1], [0, 0, 1, 1], [], []>} : vector<16x32xf32>, vector<32x32xf32>, vector<16x32xf32> -> vector<16x32xf32>
    %c32 = arith.constant 32 : index
    %c0_16 = arith.constant 0 : index
    %30 = vector.load %arg3[%c32, %c0_16] : memref<128x32xf32, #tpu.memory_space<vmem>>, vector<32x32xf32>
    %cst_17 = arith.constant dense<0.000000e+00> : vector<16x32xf32>
    %31 = tpu.matmul %27, %30, %cst_17 {dimension_numbers = #tpu.dot_dimension_numbers<[1], [0], [0], [1], [0, 0, 1, 1], [], []>} : vector<16x32xf32>, vector<32x32xf32>, vector<16x32xf32> -> vector<16x32xf32>
    %c64 = arith.constant 64 : index
    %c0_18 = arith.constant 0 : index
    %32 = vector.load %arg3[%c64, %c0_18] : memref<128x32xf32, #tpu.memory_space<vmem>>, vector<32x32xf32>
    %cst_19 = arith.constant dense<0.000000e+00> : vector<16x32xf32>
    %33 = tpu.matmul %27, %32, %cst_19 {dimension_numbers = #tpu.dot_dimension_numbers<[1], [0], [0], [1], [0, 0, 1, 1], [], []>} : vector<16x32xf32>, vector<32x32xf32>, vector<16x32xf32> -> vector<16x32xf32>
    %c0_20 = arith.constant 0 : index
    %c0_21 = arith.constant 0 : index
    %34 = vector.load %arg7[%c0_20, %c0_21] : memref<16x32xf32, #tpu.memory_space<vmem>>, vector<16x32xf32>
    tpu.vector_store %arg7[%c0_20, %c0_21], %31 {strides = array<i32>} : memref<16x32xf32, #tpu.memory_space<vmem>>, vector<16x32xf32>,
    %c0_22 = arith.constant 0 : index
    %c0_23 = arith.constant 0 : index
    %35 = vector.load %arg8[%c0_22, %c0_23] : memref<16x32xf32, #tpu.memory_space<vmem>>, vector<16x32xf32>
    tpu.vector_store %arg8[%c0_22, %c0_23], %33 {strides = array<i32>} : memref<16x32xf32, #tpu.memory_space<vmem>>, vector<16x32xf32>,
    %36 = vector.extract_strided_slice %29 {offsets = [0, 0], sizes = [8, 8], strides = [1, 1]} : vector<16x32xf32> to vector<8x8xf32>
    %37 = vector.extract_strided_slice %31 {offsets = [0, 0], sizes = [8, 8], strides = [1, 1]} : vector<16x32xf32> to vector<8x8xf32>
    %38 = vector.extract_strided_slice %33 {offsets = [0, 0], sizes = [8, 8], strides = [1, 1]} : vector<16x32xf32> to vector<8x8xf32>
    %cst_24 = arith.constant dense<0.000000e+00> : vector<8x8xf32>
    %39 = tpu.matmul %36, %37, %cst_24 {dimension_numbers = #tpu.dot_dimension_numbers<[1], [1], [0], [0], [0, 0, 1, 0], [], []>} : vector<8x8xf32>, vector<8x8xf32>, vector<8x8xf32> -> vector<8x8xf32>
    %cst_25 = arith.constant 0.353553385 : f32
    %40 = vector.broadcast %cst_25 : f32 to vector<8x8xf32>
    %41 = arith.mulf %39, %40 : vector<8x8xf32>
    %cst_26 = arith.constant dense<0xFF800000> : vector<8xf32>
    %42 = vector.multi_reduction <maximumf>, %41, %cst_26 [1] : vector<8x8xf32> to vector<8xf32>
    %43 = vector.shape_cast %42 : vector<8xf32> to vector<8x1xf32>
    %44 = vector.broadcast %43 : vector<8x1xf32> to vector<8x8xf32>
    %45 = arith.subf %41, %44 : vector<8x8xf32>
    %46 = math.exp %45 : vector<8x8xf32>
    %cst_27 = arith.constant dense<0.000000e+00> : vector<8xf32>
    %47 = vector.multi_reduction <add>, %46, %cst_27 [1] : vector<8x8xf32> to vector<8xf32>
    %48 = vector.shape_cast %47 : vector<8xf32> to vector<8x1xf32>
    %49 = tpu.reciprocal %48 {approx = true} : vector<8x1xf32> -> vector<8x1xf32>
    %50 = vector.broadcast %49 : vector<8x1xf32> to vector<8x8xf32>
    %51 = arith.mulf %46, %50 : vector<8x8xf32>
    %cst_28 = arith.constant dense<0.000000e+00> : vector<8x8xf32>
    %52 = tpu.matmul %51, %38, %cst_28 {dimension_numbers = #tpu.dot_dimension_numbers<[1], [0], [0], [1], [0, 0, 1, 1], [], []>} : vector<8x8xf32>, vector<8x8xf32>, vector<8x8xf32> -> vector<8x8xf32>
    %c96 = arith.constant 96 : index
    %c0_29 = arith.constant 0 : index
    %53 = vector.load %arg3[%c96, %c0_29] : memref<128x32xf32, #tpu.memory_space<vmem>>, vector<8x32xf32>
    %cst_30 = arith.constant dense<0.000000e+00> : vector<8x32xf32>
    %54 = tpu.matmul %52, %53, %cst_30 {dimension_numbers = #tpu.dot_dimension_numbers<[1], [0], [0], [1], [0, 0, 1, 1], [], []>} : vector<8x8xf32>, vector<8x32xf32>, vector<8x32xf32> -> vector<8x32xf32>
    %55 = vector.extract_strided_slice %29 {offsets = [0, 8], sizes = [8, 8], strides = [1, 1]} : vector<16x32xf32> to vector<8x8xf32>
    %56 = vector.extract_strided_slice %31 {offsets = [0, 8], sizes = [8, 8], strides = [1, 1]} : vector<16x32xf32> to vector<8x8xf32>
    %57 = vector.extract_strided_slice %33 {offsets = [0, 8], sizes = [8, 8], strides = [1, 1]} : vector<16x32xf32> to vector<8x8xf32>
    %cst_31 = arith.constant dense<0.000000e+00> : vector<8x8xf32>
    %58 = tpu.matmul %55, %56, %cst_31 {dimension_numbers = #tpu.dot_dimension_numbers<[1], [1], [0], [0], [0, 0, 1, 0], [], []>} : vector<8x8xf32>, vector<8x8xf32>, vector<8x8xf32> -> vector<8x8xf32>
    %cst_32 = arith.constant 0.353553385 : f32
    %59 = vector.broadcast %cst_32 : f32 to vector<8x8xf32>
    %60 = arith.mulf %58, %59 : vector<8x8xf32>
    %cst_33 = arith.constant dense<0xFF800000> : vector<8xf32>
    %61 = vector.multi_reduction <maximumf>, %60, %cst_33 [1] : vector<8x8xf32> to vector<8xf32>
    %62 = vector.shape_cast %61 : vector<8xf32> to vector<8x1xf32>
    %63 = vector.broadcast %62 : vector<8x1xf32> to vector<8x8xf32>
    %64 = arith.subf %60, %63 : vector<8x8xf32>
    %65 = math.exp %64 : vector<8x8xf32>
    %cst_34 = arith.constant dense<0.000000e+00> : vector<8xf32>
    %66 = vector.multi_reduction <add>, %65, %cst_34 [1] : vector<8x8xf32> to vector<8xf32>
    %67 = vector.shape_cast %66 : vector<8xf32> to vector<8x1xf32>
    %68 = tpu.reciprocal %67 {approx = true} : vector<8x1xf32> -> vector<8x1xf32>
    %69 = vector.broadcast %68 : vector<8x1xf32> to vector<8x8xf32>
    %70 = arith.mulf %65, %69 : vector<8x8xf32>
    %cst_35 = arith.constant dense<0.000000e+00> : vector<8x8xf32>
    %71 = tpu.matmul %70, %57, %cst_35 {dimension_numbers = #tpu.dot_dimension_numbers<[1], [0], [0], [1], [0, 0, 1, 1], [], []>} : vector<8x8xf32>, vector<8x8xf32>, vector<8x8xf32> -> vector<8x8xf32>
    %c104 = arith.constant 104 : index
    %c0_36 = arith.constant 0 : index
    %72 = vector.load %arg3[%c104, %c0_36] : memref<128x32xf32, #tpu.memory_space<vmem>>, vector<8x32xf32>
    %cst_37 = arith.constant dense<0.000000e+00> : vector<8x32xf32>
    %73 = tpu.matmul %71, %72, %cst_37 {dimension_numbers = #tpu.dot_dimension_numbers<[1], [0], [0], [1], [0, 0, 1, 1], [], []>} : vector<8x8xf32>, vector<8x32xf32>, vector<8x32xf32> -> vector<8x32xf32>
    %74 = arith.addf %54, %73 : vector<8x32xf32>
    %75 = vector.extract_strided_slice %29 {offsets = [0, 16], sizes = [8, 8], strides = [1, 1]} : vector<16x32xf32> to vector<8x8xf32>
    %76 = vector.extract_strided_slice %31 {offsets = [0, 16], sizes = [8, 8], strides = [1, 1]} : vector<16x32xf32> to vector<8x8xf32>
    %77 = vector.extract_strided_slice %33 {offsets = [0, 16], sizes = [8, 8], strides = [1, 1]} : vector<16x32xf32> to vector<8x8xf32>
    %cst_38 = arith.constant dense<0.000000e+00> : vector<8x8xf32>
    %78 = tpu.matmul %75, %76, %cst_38 {dimension_numbers = #tpu.dot_dimension_numbers<[1], [1], [0], [0], [0, 0, 1, 0], [], []>} : vector<8x8xf32>, vector<8x8xf32>, vector<8x8xf32> -> vector<8x8xf32>
    %cst_39 = arith.constant 0.353553385 : f32
    %79 = vector.broadcast %cst_39 : f32 to vector<8x8xf32>
    %80 = arith.mulf %78, %79 : vector<8x8xf32>
    %cst_40 = arith.constant dense<0xFF800000> : vector<8xf32>
    %81 = vector.multi_reduction <maximumf>, %80, %cst_40 [1] : vector<8x8xf32> to vector<8xf32>
    %82 = vector.shape_cast %81 : vector<8xf32> to vector<8x1xf32>
    %83 = vector.broadcast %82 : vector<8x1xf32> to vector<8x8xf32>
    %84 = arith.subf %80, %83 : vector<8x8xf32>
    %85 = math.exp %84 : vector<8x8xf32>
    %cst_41 = arith.constant dense<0.000000e+00> : vector<8xf32>
    %86 = vector.multi_reduction <add>, %85, %cst_41 [1] : vector<8x8xf32> to vector<8xf32>
    %87 = vector.shape_cast %86 : vector<8xf32> to vector<8x1xf32>
    %88 = tpu.reciprocal %87 {approx = true} : vector<8x1xf32> -> vector<8x1xf32>
    %89 = vector.broadcast %88 : vector<8x1xf32> to vector<8x8xf32>
    %90 = arith.mulf %85, %89 : vector<8x8xf32>
    %cst_42 = arith.constant dense<0.000000e+00> : vector<8x8xf32>
    %91 = tpu.matmul %90, %77, %cst_42 {dimension_numbers = #tpu.dot_dimension_numbers<[1], [0], [0], [1], [0, 0, 1, 1], [], []>} : vector<8x8xf32>, vector<8x8xf32>, vector<8x8xf32> -> vector<8x8xf32>
    %c112 = arith.constant 112 : index
    %c0_43 = arith.constant 0 : index
    %92 = vector.load %arg3[%c112, %c0_43] : memref<128x32xf32, #tpu.memory_space<vmem>>, vector<8x32xf32>
    %cst_44 = arith.constant dense<0.000000e+00> : vector<8x32xf32>
    %93 = tpu.matmul %91, %92, %cst_44 {dimension_numbers = #tpu.dot_dimension_numbers<[1], [0], [0], [1], [0, 0, 1, 1], [], []>} : vector<8x8xf32>, vector<8x32xf32>, vector<8x32xf32> -> vector<8x32xf32>
    %94 = arith.addf %74, %93 : vector<8x32xf32>
    %95 = vector.extract_strided_slice %29 {offsets = [0, 24], sizes = [8, 8], strides = [1, 1]} : vector<16x32xf32> to vector<8x8xf32>
    %96 = vector.extract_strided_slice %31 {offsets = [0, 24], sizes = [8, 8], strides = [1, 1]} : vector<16x32xf32> to vector<8x8xf32>
    %97 = vector.extract_strided_slice %33 {offsets = [0, 24], sizes = [8, 8], strides = [1, 1]} : vector<16x32xf32> to vector<8x8xf32>
    %cst_45 = arith.constant dense<0.000000e+00> : vector<8x8xf32>
    %98 = tpu.matmul %95, %96, %cst_45 {dimension_numbers = #tpu.dot_dimension_numbers<[1], [1], [0], [0], [0, 0, 1, 0], [], []>} : vector<8x8xf32>, vector<8x8xf32>, vector<8x8xf32> -> vector<8x8xf32>
    %cst_46 = arith.constant 0.353553385 : f32
    %99 = vector.broadcast %cst_46 : f32 to vector<8x8xf32>
    %100 = arith.mulf %98, %99 : vector<8x8xf32>
    %cst_47 = arith.constant dense<0xFF800000> : vector<8xf32>
    %101 = vector.multi_reduction <maximumf>, %100, %cst_47 [1] : vector<8x8xf32> to vector<8xf32>
    %102 = vector.shape_cast %101 : vector<8xf32> to vector<8x1xf32>
    %103 = vector.broadcast %102 : vector<8x1xf32> to vector<8x8xf32>
    %104 = arith.subf %100, %103 : vector<8x8xf32>
    %105 = math.exp %104 : vector<8x8xf32>
    %cst_48 = arith.constant dense<0.000000e+00> : vector<8xf32>
    %106 = vector.multi_reduction <add>, %105, %cst_48 [1] : vector<8x8xf32> to vector<8xf32>
    %107 = vector.shape_cast %106 : vector<8xf32> to vector<8x1xf32>
    %108 = tpu.reciprocal %107 {approx = true} : vector<8x1xf32> -> vector<8x1xf32>
    %109 = vector.broadcast %108 : vector<8x1xf32> to vector<8x8xf32>
    %110 = arith.mulf %105, %109 : vector<8x8xf32>
    %cst_49 = arith.constant dense<0.000000e+00> : vector<8x8xf32>
    %111 = tpu.matmul %110, %97, %cst_49 {dimension_numbers = #tpu.dot_dimension_numbers<[1], [0], [0], [1], [0, 0, 1, 1], [], []>} : vector<8x8xf32>, vector<8x8xf32>, vector<8x8xf32> -> vector<8x8xf32>
    %c120 = arith.constant 120 : index
    %c0_50 = arith.constant 0 : index
    %112 = vector.load %arg3[%c120, %c0_50] : memref<128x32xf32, #tpu.memory_space<vmem>>, vector<8x32xf32>
    %cst_51 = arith.constant dense<0.000000e+00> : vector<8x32xf32>
    %113 = tpu.matmul %111, %112, %cst_51 {dimension_numbers = #tpu.dot_dimension_numbers<[1], [0], [0], [1], [0, 0, 1, 1], [], []>} : vector<8x8xf32>, vector<8x32xf32>, vector<8x32xf32> -> vector<8x32xf32>
    %114 = arith.addf %94, %113 : vector<8x32xf32>
    %115 = vector.extract_strided_slice %29 {offsets = [8, 0], sizes = [8, 8], strides = [1, 1]} : vector<16x32xf32> to vector<8x8xf32>
    %116 = vector.extract_strided_slice %31 {offsets = [8, 0], sizes = [8, 8], strides = [1, 1]} : vector<16x32xf32> to vector<8x8xf32>
    %117 = vector.extract_strided_slice %33 {offsets = [8, 0], sizes = [8, 8], strides = [1, 1]} : vector<16x32xf32> to vector<8x8xf32>
    %cst_52 = arith.constant dense<0.000000e+00> : vector<8x8xf32>
    %118 = tpu.matmul %115, %116, %cst_52 {dimension_numbers = #tpu.dot_dimension_numbers<[1], [1], [0], [0], [0, 0, 1, 0], [], []>} : vector<8x8xf32>, vector<8x8xf32>, vector<8x8xf32> -> vector<8x8xf32>
    %cst_53 = arith.constant 0.353553385 : f32
    %119 = vector.broadcast %cst_53 : f32 to vector<8x8xf32>
    %120 = arith.mulf %118, %119 : vector<8x8xf32>
    %cst_54 = arith.constant dense<0xFF800000> : vector<8xf32>
    %121 = vector.multi_reduction <maximumf>, %120, %cst_54 [1] : vector<8x8xf32> to vector<8xf32>
    %122 = vector.shape_cast %121 : vector<8xf32> to vector<8x1xf32>
    %123 = vector.broadcast %122 : vector<8x1xf32> to vector<8x8xf32>
    %124 = arith.subf %120, %123 : vector<8x8xf32>
    %125 = math.exp %124 : vector<8x8xf32>
    %cst_55 = arith.constant dense<0.000000e+00> : vector<8xf32>
    %126 = vector.multi_reduction <add>, %125, %cst_55 [1] : vector<8x8xf32> to vector<8xf32>
    %127 = vector.shape_cast %126 : vector<8xf32> to vector<8x1xf32>
    %128 = tpu.reciprocal %127 {approx = true} : vector<8x1xf32> -> vector<8x1xf32>
    %129 = vector.broadcast %128 : vector<8x1xf32> to vector<8x8xf32>
    %130 = arith.mulf %125, %129 : vector<8x8xf32>
    %cst_56 = arith.constant dense<0.000000e+00> : vector<8x8xf32>
    %131 = tpu.matmul %130, %117, %cst_56 {dimension_numbers = #tpu.dot_dimension_numbers<[1], [0], [0], [1], [0, 0, 1, 1], [], []>} : vector<8x8xf32>, vector<8x8xf32>, vector<8x8xf32> -> vector<8x8xf32>
    %c96_57 = arith.constant 96 : index
    %c0_58 = arith.constant 0 : index
    %132 = vector.load %arg3[%c96_57, %c0_58] : memref<128x32xf32, #tpu.memory_space<vmem>>, vector<8x32xf32>
    %cst_59 = arith.constant dense<0.000000e+00> : vector<8x32xf32>
    %133 = tpu.matmul %131, %132, %cst_59 {dimension_numbers = #tpu.dot_dimension_numbers<[1], [0], [0], [1], [0, 0, 1, 1], [], []>} : vector<8x8xf32>, vector<8x32xf32>, vector<8x32xf32> -> vector<8x32xf32>
    %134 = vector.extract_strided_slice %29 {offsets = [8, 8], sizes = [8, 8], strides = [1, 1]} : vector<16x32xf32> to vector<8x8xf32>
    %135 = vector.extract_strided_slice %31 {offsets = [8, 8], sizes = [8, 8], strides = [1, 1]} : vector<16x32xf32> to vector<8x8xf32>
    %136 = vector.extract_strided_slice %33 {offsets = [8, 8], sizes = [8, 8], strides = [1, 1]} : vector<16x32xf32> to vector<8x8xf32>
    %cst_60 = arith.constant dense<0.000000e+00> : vector<8x8xf32>
    %137 = tpu.matmul %134, %135, %cst_60 {dimension_numbers = #tpu.dot_dimension_numbers<[1], [1], [0], [0], [0, 0, 1, 0], [], []>} : vector<8x8xf32>, vector<8x8xf32>, vector<8x8xf32> -> vector<8x8xf32>
    %cst_61 = arith.constant 0.353553385 : f32
    %138 = vector.broadcast %cst_61 : f32 to vector<8x8xf32>
    %139 = arith.mulf %137, %138 : vector<8x8xf32>
    %cst_62 = arith.constant dense<0xFF800000> : vector<8xf32>
    %140 = vector.multi_reduction <maximumf>, %139, %cst_62 [1] : vector<8x8xf32> to vector<8xf32>
    %141 = vector.shape_cast %140 : vector<8xf32> to vector<8x1xf32>
    %142 = vector.broadcast %141 : vector<8x1xf32> to vector<8x8xf32>
    %143 = arith.subf %139, %142 : vector<8x8xf32>
    %144 = math.exp %143 : vector<8x8xf32>
    %cst_63 = arith.constant dense<0.000000e+00> : vector<8xf32>
    %145 = vector.multi_reduction <add>, %144, %cst_63 [1] : vector<8x8xf32> to vector<8xf32>
    %146 = vector.shape_cast %145 : vector<8xf32> to vector<8x1xf32>
    %147 = tpu.reciprocal %146 {approx = true} : vector<8x1xf32> -> vector<8x1xf32>
    %148 = vector.broadcast %147 : vector<8x1xf32> to vector<8x8xf32>
    %149 = arith.mulf %144, %148 : vector<8x8xf32>
    %cst_64 = arith.constant dense<0.000000e+00> : vector<8x8xf32>
    %150 = tpu.matmul %149, %136, %cst_64 {dimension_numbers = #tpu.dot_dimension_numbers<[1], [0], [0], [1], [0, 0, 1, 1], [], []>} : vector<8x8xf32>, vector<8x8xf32>, vector<8x8xf32> -> vector<8x8xf32>
    %c104_65 = arith.constant 104 : index
    %c0_66 = arith.constant 0 : index
    %151 = vector.load %arg3[%c104_65, %c0_66] : memref<128x32xf32, #tpu.memory_space<vmem>>, vector<8x32xf32>
    %cst_67 = arith.constant dense<0.000000e+00> : vector<8x32xf32>
    %152 = tpu.matmul %150, %151, %cst_67 {dimension_numbers = #tpu.dot_dimension_numbers<[1], [0], [0], [1], [0, 0, 1, 1], [], []>} : vector<8x8xf32>, vector<8x32xf32>, vector<8x32xf32> -> vector<8x32xf32>
    %153 = arith.addf %133, %152 : vector<8x32xf32>
    %154 = vector.extract_strided_slice %29 {offsets = [8, 16], sizes = [8, 8], strides = [1, 1]} : vector<16x32xf32> to vector<8x8xf32>
    %155 = vector.extract_strided_slice %31 {offsets = [8, 16], sizes = [8, 8], strides = [1, 1]} : vector<16x32xf32> to vector<8x8xf32>
    %156 = vector.extract_strided_slice %33 {offsets = [8, 16], sizes = [8, 8], strides = [1, 1]} : vector<16x32xf32> to vector<8x8xf32>
    %cst_68 = arith.constant dense<0.000000e+00> : vector<8x8xf32>
    %157 = tpu.matmul %154, %155, %cst_68 {dimension_numbers = #tpu.dot_dimension_numbers<[1], [1], [0], [0], [0, 0, 1, 0], [], []>} : vector<8x8xf32>, vector<8x8xf32>, vector<8x8xf32> -> vector<8x8xf32>
    %cst_69 = arith.constant 0.353553385 : f32
    %158 = vector.broadcast %cst_69 : f32 to vector<8x8xf32>
    %159 = arith.mulf %157, %158 : vector<8x8xf32>
    %cst_70 = arith.constant dense<0xFF800000> : vector<8xf32>
    %160 = vector.multi_reduction <maximumf>, %159, %cst_70 [1] : vector<8x8xf32> to vector<8xf32>
    %161 = vector.shape_cast %160 : vector<8xf32> to vector<8x1xf32>
    %162 = vector.broadcast %161 : vector<8x1xf32> to vector<8x8xf32>
    %163 = arith.subf %159, %162 : vector<8x8xf32>
    %164 = math.exp %163 : vector<8x8xf32>
    %cst_71 = arith.constant dense<0.000000e+00> : vector<8xf32>
    %165 = vector.multi_reduction <add>, %164, %cst_71 [1] : vector<8x8xf32> to vector<8xf32>
    %166 = vector.shape_cast %165 : vector<8xf32> to vector<8x1xf32>
    %167 = tpu.reciprocal %166 {approx = true} : vector<8x1xf32> -> vector<8x1xf32>
    %168 = vector.broadcast %167 : vector<8x1xf32> to vector<8x8xf32>
    %169 = arith.mulf %164, %168 : vector<8x8xf32>
    %cst_72 = arith.constant dense<0.000000e+00> : vector<8x8xf32>
    %170 = tpu.matmul %169, %156, %cst_72 {dimension_numbers = #tpu.dot_dimension_numbers<[1], [0], [0], [1], [0, 0, 1, 1], [], []>} : vector<8x8xf32>, vector<8x8xf32>, vector<8x8xf32> -> vector<8x8xf32>
    %c112_73 = arith.constant 112 : index
    %c0_74 = arith.constant 0 : index
    %171 = vector.load %arg3[%c112_73, %c0_74] : memref<128x32xf32, #tpu.memory_space<vmem>>, vector<8x32xf32>
    %cst_75 = arith.constant dense<0.000000e+00> : vector<8x32xf32>
    %172 = tpu.matmul %170, %171, %cst_75 {dimension_numbers = #tpu.dot_dimension_numbers<[1], [0], [0], [1], [0, 0, 1, 1], [], []>} : vector<8x8xf32>, vector<8x32xf32>, vector<8x32xf32> -> vector<8x32xf32>
    %173 = arith.addf %153, %172 : vector<8x32xf32>
    %174 = vector.extract_strided_slice %29 {offsets = [8, 24], sizes = [8, 8], strides = [1, 1]} : vector<16x32xf32> to vector<8x8xf32>
    %175 = vector.extract_strided_slice %31 {offsets = [8, 24], sizes = [8, 8], strides = [1, 1]} : vector<16x32xf32> to vector<8x8xf32>
    %176 = vector.extract_strided_slice %33 {offsets = [8, 24], sizes = [8, 8], strides = [1, 1]} : vector<16x32xf32> to vector<8x8xf32>
    %cst_76 = arith.constant dense<0.000000e+00> : vector<8x8xf32>
    %177 = tpu.matmul %174, %175, %cst_76 {dimension_numbers = #tpu.dot_dimension_numbers<[1], [1], [0], [0], [0, 0, 1, 0], [], []>} : vector<8x8xf32>, vector<8x8xf32>, vector<8x8xf32> -> vector<8x8xf32>
    %cst_77 = arith.constant 0.353553385 : f32
    %178 = vector.broadcast %cst_77 : f32 to vector<8x8xf32>
    %179 = arith.mulf %177, %178 : vector<8x8xf32>
    %cst_78 = arith.constant dense<0xFF800000> : vector<8xf32>
    %180 = vector.multi_reduction <maximumf>, %179, %cst_78 [1] : vector<8x8xf32> to vector<8xf32>
    %181 = vector.shape_cast %180 : vector<8xf32> to vector<8x1xf32>
    %182 = vector.broadcast %181 : vector<8x1xf32> to vector<8x8xf32>
    %183 = arith.subf %179, %182 : vector<8x8xf32>
    %184 = math.exp %183 : vector<8x8xf32>
    %cst_79 = arith.constant dense<0.000000e+00> : vector<8xf32>
    %185 = vector.multi_reduction <add>, %184, %cst_79 [1] : vector<8x8xf32> to vector<8xf32>
    %186 = vector.shape_cast %185 : vector<8xf32> to vector<8x1xf32>
    %187 = tpu.reciprocal %186 {approx = true} : vector<8x1xf32> -> vector<8x1xf32>
    %188 = vector.broadcast %187 : vector<8x1xf32> to vector<8x8xf32>
    %189 = arith.mulf %184, %188 : vector<8x8xf32>
    %cst_80 = arith.constant dense<0.000000e+00> : vector<8x8xf32>
    %190 = tpu.matmul %189, %176, %cst_80 {dimension_numbers = #tpu.dot_dimension_numbers<[1], [0], [0], [1], [0, 0, 1, 1], [], []>} : vector<8x8xf32>, vector<8x8xf32>, vector<8x8xf32> -> vector<8x8xf32>
    %c120_81 = arith.constant 120 : index
    %c0_82 = arith.constant 0 : index
    %191 = vector.load %arg3[%c120_81, %c0_82] : memref<128x32xf32, #tpu.memory_space<vmem>>, vector<8x32xf32>
    %cst_83 = arith.constant dense<0.000000e+00> : vector<8x32xf32>
    %192 = tpu.matmul %190, %191, %cst_83 {dimension_numbers = #tpu.dot_dimension_numbers<[1], [0], [0], [1], [0, 0, 1, 1], [], []>} : vector<8x8xf32>, vector<8x32xf32>, vector<8x32xf32> -> vector<8x32xf32>
    %193 = arith.addf %173, %192 : vector<8x32xf32>
    %194 = tpu.concatenate %114, %193 in 0 : vector<8x32xf32>, vector<8x32xf32> -> vector<16x32xf32>
    %195 = vector.broadcast %3 : vector<1x32xf32> to vector<16x32xf32>
    %196 = arith.addf %194, %195 : vector<16x32xf32>
    %197 = arith.addf %196, %196 : vector<16x32xf32>
    %cst_84 = arith.constant dense<0.000000e+00> : vector<16xf32>
    %198 = vector.multi_reduction <add>, %197, %cst_84 [1] : vector<16x32xf32> to vector<16xf32>
    %199 = vector.shape_cast %198 : vector<16xf32> to vector<16x1xf32>
    %cst_85 = arith.constant 3.200000e+01 : f32
    %200 = vector.broadcast %cst_85 : f32 to vector<16x1xf32>
    %201 = arith.divf %199, %200 : vector<16x1xf32>
    %202 = vector.broadcast %201 : vector<16x1xf32> to vector<16x32xf32>
    %203 = arith.subf %197, %202 : vector<16x32xf32>
    %204 = arith.mulf %203, %203 : vector<16x32xf32>
    %cst_86 = arith.constant dense<0.000000e+00> : vector<16xf32>
    %205 = vector.multi_reduction <add>, %204, %cst_86 [1] : vector<16x32xf32> to vector<16xf32>
    %206 = vector.shape_cast %205 : vector<16xf32> to vector<16x1xf32>
    %cst_87 = arith.constant 3.200000e+01 : f32
    %207 = vector.broadcast %cst_87 : f32 to vector<16x1xf32>
    %208 = arith.divf %206, %207 : vector<16x1xf32>
    %cst_88 = arith.constant 9.99999974E-6 : f32
    %209 = vector.broadcast %cst_88 : f32 to vector<16x1xf32>
    %210 = arith.addf %208, %209 : vector<16x1xf32>
    %211 = math.rsqrt %210 : vector<16x1xf32>
    %212 = vector.broadcast %211 : vector<16x1xf32> to vector<16x32xf32>
    %213 = arith.mulf %203, %212 : vector<16x32xf32>
    %214 = vector.broadcast %4 : vector<1x32xf32> to vector<16x32xf32>
    %215 = arith.mulf %213, %214 : vector<16x32xf32>
    %216 = vector.broadcast %5 : vector<1x32xf32> to vector<16x32xf32>
    %217 = arith.addf %215, %216 : vector<16x32xf32>
    %c0_89 = arith.constant 0 : index
    %c0_90 = arith.constant 0 : index
    %218 = vector.load %arg4[%c0_89, %c0_90] : memref<32x128xf32, #tpu.memory_space<vmem>>, vector<32x128xf32>
    %cst_91 = arith.constant dense<0.000000e+00> : vector<16x128xf32>
    %219 = tpu.matmul %217, %218, %cst_91 {dimension_numbers = #tpu.dot_dimension_numbers<[1], [0], [0], [1], [0, 0, 1, 1], [], []>} : vector<16x32xf32>, vector<32x128xf32>, vector<16x128xf32> -> vector<16x128xf32>
    %220 = vector.broadcast %7 : vector<1x128xf32> to vector<16x128xf32>
    %221 = arith.addf %219, %220 : vector<16x128xf32>
    %cst_92 = arith.constant 5.000000e-01 : f32
    %222 = vector.broadcast %cst_92 : f32 to vector<16x128xf32>
    %223 = arith.mulf %222, %221 : vector<16x128xf32>
    %cst_93 = arith.constant 0.707106769 : f32
    %224 = vector.broadcast %cst_93 : f32 to vector<16x128xf32>
    %225 = arith.mulf %221, %224 : vector<16x128xf32>
    %226 = math.erf %225 : vector<16x128xf32>
    %cst_94 = arith.constant 1.000000e+00 : f32
    %227 = vector.broadcast %cst_94 : f32 to vector<16x128xf32>
    %228 = arith.addf %227, %226 : vector<16x128xf32>
    %229 = arith.mulf %223, %228 : vector<16x128xf32>
    %c0_95 = arith.constant 0 : index
    %c0_96 = arith.constant 0 : index
    %230 = vector.load %arg5[%c0_95, %c0_96] : memref<128x32xf32, #tpu.memory_space<vmem>>, vector<128x32xf32>
    %cst_97 = arith.constant dense<0.000000e+00> : vector<16x32xf32>
    %231 = tpu.matmul %229, %230, %cst_97 {dimension_numbers = #tpu.dot_dimension_numbers<[1], [0], [0], [1], [0, 0, 1, 1], [], []>} : vector<16x128xf32>, vector<128x32xf32>, vector<16x32xf32> -> vector<16x32xf32>
    %232 = vector.broadcast %6 : vector<1x32xf32> to vector<16x32xf32>
    %233 = arith.addf %231, %232 : vector<16x32xf32>
    %234 = arith.addf %197, %233 : vector<16x32xf32>
    %c0_98 = arith.constant 0 : index
    %c0_99 = arith.constant 0 : index
    %235 = vector.load %arg6[%c0_98, %c0_99] : memref<16x32xf32, #tpu.memory_space<vmem>>, vector<16x32xf32>
    tpu.vector_store %arg6[%c0_98, %c0_99], %234 {strides = array<i32>} : memref<16x32xf32, #tpu.memory_space<vmem>>, vector<16x32xf32>,
    return
  }
  func.func @transform_0(%arg0: i32) -> (i32, i32) {
    %c0_i32 = arith.constant 0 : i32
    %c0_i32_0 = arith.constant 0 : i32
    return %arg0, %c0_i32 : i32, i32
  }
  func.func @transform_1(%arg0: i32) -> (i32, i32) {
    %c0_i32 = arith.constant 0 : i32
    %c0_i32_0 = arith.constant 0 : i32
    %c0_i32_1 = arith.constant 0 : i32
    return %c0_i32, %c0_i32_0 : i32, i32
  }
  func.func @transform_2(%arg0: i32) -> (i32, i32) {
    %c0_i32 = arith.constant 0 : i32
    %c0_i32_0 = arith.constant 0 : i32
    %c0_i32_1 = arith.constant 0 : i32
    return %c0_i32, %c0_i32_0 : i32, i32
  }
  func.func @transform_3(%arg0: i32) -> (i32, i32) {
    %c0_i32 = arith.constant 0 : i32
    %c0_i32_0 = arith.constant 0 : i32
    %c0_i32_1 = arith.constant 0 : i32
    return %c0_i32, %c0_i32_0 : i32, i32
  }
  func.func @transform_4(%arg0: i32) -> (i32, i32) {
    %c0_i32 = arith.constant 0 : i32
    %c0_i32_0 = arith.constant 0 : i32
    %c0_i32_1 = arith.constant 0 : i32
    return %c0_i32, %c0_i32_0 : i32, i32
  }
  func.func @transform_5(%arg0: i32) -> (i32, i32) {
    %c0_i32 = arith.constant 0 : i32
    %c0_i32_0 = arith.constant 0 : i32
    return %arg0, %c0_i32 : i32, i32
  }
  func.func @transform_6(%arg0: i32) -> (i32, i32) {
    %c0_i32 = arith.constant 0 : i32
    %c0_i32_0 = arith.constant 0 : i32
    return %arg0, %c0_i32 : i32, i32
  }
  func.func @transform_7(%arg0: i32) -> (i32, i32) {
    %c0_i32 = arith.constant 0 : i32
    %c0_i32_0 = arith.constant 0 : i32
    return %arg0, %c0_i32 : i32, i32
  }
}

</mosaic_0001>

<llo_original>
// kernel: tpu_custom_call.1
$region0: #{tpu_custom_call.1}
  #allocation0 [shape = 'u32[]', space=smem, size = 0x4, offset = 0x4, fixed_abs, tag = 'smem constant byte address 0x4 - core index']
  #allocation1 [shape = 'u32[72,128]{1,0:T(1,128)}', space=vmem, size = 0x9000, scoped, tag = 'internal scratch']
  %s0 = inlined_call_operand.vmem [shape: f32[16,32], index: 0, kind: input, shape index: {}]
  %s1 = inlined_call_operand.vmem [shape: f32[8,128], index: 1, kind: input, shape index: {}]
  %s2 = inlined_call_operand.vmem [shape: f32[128,32], index: 2, kind: input, shape index: {}]
  %s3 = inlined_call_operand.vmem [shape: f32[32,128], index: 3, kind: input, shape index: {}]
  %s4 = inlined_call_operand.vmem [shape: f32[128,32], index: 4, kind: input, shape index: {}]
  %s5 = inlined_call_operand.hbm [shape: f32[16,32], index: 5, kind: output, shape index: {0}]
  %s6 = inlined_call_operand.hbm [shape: f32[16,32], index: 6, kind: output, shape index: {1}]
  %s7 = inlined_call_operand.hbm [shape: f32[16,32], index: 7, kind: output, shape index: {2}]
  %8 = xla_tuple %s5, %s6, %s7
  %s9 = sld [smem:[#allocation0]]
  $region46: #{tpu_custom_call.1} parent=0
    _
  %s11 = ssub.s32 1, %s9
  %s12 = scalar_select 0, %s11, %s9
  $region1: #{tpu_custom_call.1} parent=0
    #allocation2 [shape = 'u8[8192]{0}', space=vmem, size = 0x2000, scoped, tag = 'output window, operand 0, single buffered']
    #allocation3 [shape = 's32[1]{0}', space=sflag, size = 0x4, scoped, tag = 'scoped memory for tpu_custom_call.1']
    #allocation4 [shape = 'u8[8192]{0}', space=vmem, size = 0x2000, scoped, tag = 'output window, operand 1, single buffered']
    #allocation5 [shape = 's32[1]{0}', space=sflag, size = 0x4, scoped, tag = 'scoped memory for tpu_custom_call.1']
    #allocation6 [shape = 'u8[8192]{0}', space=vmem, size = 0x2000, scoped, tag = 'output window, operand 2, single buffered']
    %13 = vsyncpa [#allocation3], 0
    %14 = vsyncpa [#allocation5], 0
    // Predicated region
    $region2: #{tpu_custom_call.1} parent=1 // pred_check
      _
    $region3: #{tpu_custom_call.1} parent=1 // pred_check_branch
      %16 = sbr.rel (0) target = $region5
    $region4: #{tpu_custom_call.1} parent=1 // pred_region
      _
    $region5: #{tpu_custom_call.1} parent=1 // pred_fallthru
      _
    // Predicated region
    $region6: #{tpu_custom_call.1} parent=1 // pred_check
      _
    $region7: #{tpu_custom_call.1} parent=1 // pred_check_branch
      %18 = sbr.rel (0) target = $region9
    $region8: #{tpu_custom_call.1} parent=1 // pred_region
      _
    $region9: #{tpu_custom_call.1} parent=1 // pred_fallthru
      _
    // Predicated region
    $region10: #{tpu_custom_call.1} parent=1 // pred_check
      _
    $region11: #{tpu_custom_call.1} parent=1 // pred_check_branch
      %20 = sbr.rel (0) target = $region13
    $region12: #{tpu_custom_call.1} parent=1 // pred_region
      _
    $region13: #{tpu_custom_call.1} parent=1 // pred_fallthru
      _
    // Predicated region
    $region14: #{tpu_custom_call.1} parent=1 // pred_check
      _
    $region15: #{tpu_custom_call.1} parent=1 // pred_check_branch
      %22 = sbr.rel (0) target = $region17
    $region16: #{tpu_custom_call.1} parent=1 // pred_region
      _
    $region17: #{tpu_custom_call.1} parent=1 // pred_fallthru
      _
    // Predicated region
    $region18: #{tpu_custom_call.1} parent=1 // pred_check
      _
    $region19: #{tpu_custom_call.1} parent=1 // pred_check_branch
      %24 = sbr.rel (0) target = $region21
    $region20: #{tpu_custom_call.1} parent=1 // pred_region
      _
    $region21: #{tpu_custom_call.1} parent=1 // pred_fallthru
      _
    %v25 = vld [vmem:[%s0] sm:$0xff]
    %v26 = vld [vmem:[%s0 + $0x8] sm:$0xff]
    %v27 = vld [vmem:[%s1] sm:$0x1]
    %v28 = vld [vmem:[%s1 + $0x1] sm:$0x1]
    %v29 = vld [vmem:[%s1 + $0x2] sm:$0x1]
    %v30 = vld [vmem:[%s1 + $0x3] sm:$0x1]
    %v31 = vld [vmem:[%s1 + $0x4] sm:$0x1]
    %v32 = vld [vmem:[%s1 + $0x5] sm:$0x1]
    %v33 = vld [vmem:[%s1 + $0x6] sm:$0x1]
    %vm34 = vcmask 261120
    %v35 = vsel %vm34, %v25, 0.0
    %36 = vadd.xlane.f32.xlu0 %v35
    %v37 = vpop.xlane.xlu0 %36
    %v38 = vsel %vm34, %v26, 0.0
    %39 = vadd.xlane.f32.xlu0 %v38
    %v40 = vpop.xlane.xlu0 %39
    %v41 = vrcp.pop 32.0
    %v42 = vmul.f32 32.0, %v41
    %v43 = vsub.f32 1.0, %v42
    %v44 = vmul.f32 %v41, %v43
    %v45 = vadd.f32 %v41, %v44
    %vm46 = vweird.f32 %v41
    %v47 = vsel %vm46, %v41, %v45
    %v48 = vmul.f32 %v37, %v47
    %v49 = vmul.f32 %v40, %v47
    %v50 = vsub.f32 %v25, %v48
    %v51 = vsub.f32 %v26, %v49
    %v52 = vmul.f32 %v50, %v50
    %v53 = vmul.f32 %v51, %v51
    %v54 = vsel %vm34, %v52, 0.0
    %55 = vadd.xlane.f32.xlu0 %v54
    %v56 = vpop.xlane.xlu0 %55
    %v57 = vsel %vm34, %v53, 0.0
    %58 = vadd.xlane.f32.xlu0 %v57
    %v59 = vpop.xlane.xlu0 %58
    %v60 = vmul.f32 %v56, %v47
    %v61 = vmul.f32 %v59, %v47
    %v62 = vadd.f32 %v60, 1e-05
    %v63 = vadd.f32 %v61, 1e-05
    %v64 = vrsqrt.pop %v62
    %v65 = vmul.f32 %v64, %v62
    %v66 = vmul.f32 %v65, %v64
    %v67 = vmul.f32 0.5, %v66
    %v68 = vsub.f32 1.5, %v67
    %v69 = vmul.f32 %v64, %v68
    %vm70 = vweird.f32 %v62
    %vm71 = vweird.f32 %v64
    %vm72 = vmor %vm70, %vm71
    %v73 = vsel %vm72, %v64, %v69
    %v74 = vrsqrt.pop %v63
    %v75 = vmul.f32 %v74, %v63
    %v76 = vmul.f32 %v75, %v74
    %v77 = vmul.f32 0.5, %v76
    %v78 = vsub.f32 1.5, %v77
    %v79 = vmul.f32 %v74, %v78
    %vm80 = vweird.f32 %v63
    %vm81 = vweird.f32 %v74
    %vm82 = vmor %vm80, %vm81
    %v83 = vsel %vm82, %v74, %v79
    %v84 = vmul.f32 %v50, %v73
    %v85 = vmul.f32 %v51, %v83
    %v86 = vperm.slane %v27, 0
    %v87 = vmul.f32 %v84, %v86
    %v88 = vmul.f32 %v85, %v86
    %v89 = vperm.slane %v28, 0
    %v90 = vadd.f32 %v87, %v89
    %v91 = vadd.f32 %v88, %v89
    %v92 = vld [vmem:[%s2] sm:$0xff]
    %v93 = vld [vmem:[%s2 + $0x8] sm:$0xff]
    %v94 = vld [vmem:[%s2 + $0x10] sm:$0xff]
    %v95 = vld [vmem:[%s2 + $0x18] sm:$0xff]
    %v97 = vsel %vm34, %v90, 0
    %v100 = vsel %vm34, %v91, 0
    %102 = vmatpush.msra.mxu0 0.0
    %103 = vmatpush.msra.mxu0 0.0
    %104 = vmatpush.msra.mxu0 0.0
    %105 = vmatpush.msra.mxu0 0.0
    %106 = vmatpush.msra.mxu0 0.0
    %107 = vmatpush.msra.mxu0 0.0
    %108 = vmatpush.msra.mxu0 0.0
    %109 = vmatpush.msra.mxu0 0.0
    %110 = vmatpush.msra.mxu0 0.0
    %111 = vmatpush.msra.mxu0 0.0
    %112 = vmatpush.msra.mxu0 0.0
    %113 = vmatpush.msra.mxu0 0.0
    %114 = vmatpush.msra.mxu0 %v95
    %115 = vmatpush.msra.mxu0 %v94
    %116 = vmatpush.msra.mxu0 %v93
    %117 = vmatpush.msra.mxu0 %v92
    %118 = vmatmul.f32.gmra.mxu0 %v97
    %v119 = vpop.f32.mrf.mxu0
    %v120 = vadd.f32 0.0, %v119
    %121 = vmatmul.f32.gmra.mxu0 %v100
    %v122 = vpop.f32.mrf.mxu0
    %v123 = vadd.f32 0.0, %v122
    %124 = vdwg.mxu0
    %v125 = vld [vmem:[%s2 + $0x20] sm:$0xff]
    %v126 = vld [vmem:[%s2 + $0x28] sm:$0xff]
    %v127 = vld [vmem:[%s2 + $0x30] sm:$0xff]
    %v128 = vld [vmem:[%s2 + $0x38] sm:$0xff]
    %129 = vmatpush.msra.mxu0 0.0
    %130 = vmatpush.msra.mxu0 0.0
    %131 = vmatpush.msra.mxu0 0.0
    %132 = vmatpush.msra.mxu0 0.0
    %133 = vmatpush.msra.mxu0 0.0
    %134 = vmatpush.msra.mxu0 0.0
    %135 = vmatpush.msra.mxu0 0.0
    %136 = vmatpush.msra.mxu0 0.0
    %137 = vmatpush.msra.mxu0 0.0
    %138 = vmatpush.msra.mxu0 0.0
    %139 = vmatpush.msra.mxu0 0.0
    %140 = vmatpush.msra.mxu0 0.0
    %141 = vmatpush.msra.mxu0 %v128
    %142 = vmatpush.msra.mxu0 %v127
    %143 = vmatpush.msra.mxu0 %v126
    %144 = vmatpush.msra.mxu0 %v125
    %145 = vmatmul.f32.gmra.mxu0 %v97
    %v146 = vpop.f32.mrf.mxu0
    %v147 = vadd.f32 0.0, %v146
    %148 = vmatmul.f32.gmra.mxu0 %v100
    %v149 = vpop.f32.mrf.mxu0
    %v150 = vadd.f32 0.0, %v149
    %151 = vdwg.mxu0
    %v152 = vld [vmem:[%s2 + $0x40] sm:$0xff]
    %v153 = vld [vmem:[%s2 + $0x48] sm:$0xff]
    %v154 = vld [vmem:[%s2 + $0x50] sm:$0xff]
    %v155 = vld [vmem:[%s2 + $0x58] sm:$0xff]
    %156 = vmatpush.msra.mxu0 0.0
    %157 = vmatpush.msra.mxu0 0.0
    %158 = vmatpush.msra.mxu0 0.0
    %159 = vmatpush.msra.mxu0 0.0
    %160 = vmatpush.msra.mxu0 0.0
    %161 = vmatpush.msra.mxu0 0.0
    %162 = vmatpush.msra.mxu0 0.0
    %163 = vmatpush.msra.mxu0 0.0
    %164 = vmatpush.msra.mxu0 0.0
    %165 = vmatpush.msra.mxu0 0.0
    %166 = vmatpush.msra.mxu0 0.0
    %167 = vmatpush.msra.mxu0 0.0
    %168 = vmatpush.msra.mxu0 %v155
    %169 = vmatpush.msra.mxu0 %v154
    %170 = vmatpush.msra.mxu0 %v153
    %171 = vmatpush.msra.mxu0 %v152
    %172 = vmatmul.f32.gmra.mxu0 %v97
    %v173 = vpop.f32.mrf.mxu0
    %v174 = vadd.f32 0.0, %v173
    %175 = vmatmul.f32.gmra.mxu0 %v100
    %v176 = vpop.f32.mrf.mxu0
    %v177 = vadd.f32 0.0, %v176
    %178 = vdwg.mxu0
    %179 = vst.msk [vmem:[#allocation4] sm:$0xff] %vm34, %v147
    %180 = vst.msk [vmem:[#allocation4 + $0x8] sm:$0xff] %vm34, %v150
    %181 = vst.msk [vmem:[#allocation6] sm:$0xff] %vm34, %v174
    %182 = vst.msk [vmem:[#allocation6 + $0x8] sm:$0xff] %vm34, %v177
    %vm183 = vcmask 64512
    %v185 = vsel %vm183, %v120, 0
    %v188 = vsel %vm183, %v147, 0
    %190 = vmatpush.xpose.msra.mxu0 0.0
    %191 = vmatpush.xpose.msra.mxu0 0.0
    %192 = vmatpush.xpose.msra.mxu0 0.0
    %193 = vmatpush.xpose.msra.mxu0 0.0
    %194 = vmatpush.xpose.msra.mxu0 0.0
    %195 = vmatpush.xpose.msra.mxu0 0.0
    %196 = vmatpush.xpose.msra.mxu0 0.0
    %197 = vmatpush.xpose.msra.mxu0 0.0
    %198 = vmatpush.xpose.msra.mxu0 0.0
    %199 = vmatpush.xpose.msra.mxu0 0.0
    %200 = vmatpush.xpose.msra.mxu0 0.0
    %201 = vmatpush.xpose.msra.mxu0 0.0
    %202 = vmatpush.xpose.msra.mxu0 0.0
    %203 = vmatpush.xpose.msra.mxu0 0.0
    %204 = vmatpush.xpose.msra.mxu0 0.0
    %205 = vmatpush.xpose.msra.mxu0 %v188
    %206 = vmatmul.f32.gmra.mxu0 %v185
    %v207 = vpop.f32.mrf.mxu0
    %v208 = vadd.f32 0.0, %v207
    %209 = vdwg.mxu0
    %v210 = vmul.f32 %v208, 0.35355338
    %v211 = vsel %vm183, %v210, -inf
    %212 = vmax.xlane.f32.xlu0 %v211
    %v213 = vpop.xlane.xlu0 %212
    %v214 = vsub.f32 %v210, %v213
    %v215 = vmul.f32 %v214, 1.442695
    %v216 = vpow.pop %v215
    %v217 = vsel %vm183, %v216, 0.0
    %218 = vadd.xlane.f32.xlu0 %v217
    %v219 = vpop.xlane.xlu0 %218
    %v220 = vrcp.pop %v219
    %v221 = vmul.f32 %v216, %v220
    %v223 = vsel %vm183, %v221, 0
    %225 = vmatpush.msra.mxu0 0.0
    %226 = vmatpush.msra.mxu0 0.0
    %227 = vmatpush.msra.mxu0 0.0
    %228 = vmatpush.msra.mxu0 0.0
    %229 = vmatpush.msra.mxu0 0.0
    %230 = vmatpush.msra.mxu0 0.0
    %231 = vmatpush.msra.mxu0 0.0
    %232 = vmatpush.msra.mxu0 0.0
    %233 = vmatpush.msra.mxu0 0.0
    %234 = vmatpush.msra.mxu0 0.0
    %235 = vmatpush.msra.mxu0 0.0
    %236 = vmatpush.msra.mxu0 0.0
    %237 = vmatpush.msra.mxu0 0.0
    %238 = vmatpush.msra.mxu0 0.0
    %239 = vmatpush.msra.mxu0 0.0
    %240 = vmatpush.msra.mxu0 %v174
    %241 = vmatmul.f32.gmra.mxu0 %v223
    %v242 = vpop.f32.mrf.mxu0
    %v243 = vadd.f32 0.0, %v242
    %244 = vdwg.mxu0
    %v245 = vld [vmem:[%s2 + $0x60] sm:$0xff]
    %246 = vrot.lane.b32.xlu0 %v120, 120
    %v247 = vpop.permute.xlu0 %246
    %248 = vrot.lane.b32.xlu0 %v147, 120
    %v249 = vpop.permute.xlu0 %248
    %v250 = vsel %vm183, %v247, 0
    %v252 = vsel %vm183, %v249, 0
    %254 = vmatpush.xpose.msra.mxu0 0.0
    %255 = vmatpush.xpose.msra.mxu0 0.0
    %256 = vmatpush.xpose.msra.mxu0 0.0
    %257 = vmatpush.xpose.msra.mxu0 0.0
    %258 = vmatpush.xpose.msra.mxu0 0.0
    %259 = vmatpush.xpose.msra.mxu0 0.0
    %260 = vmatpush.xpose.msra.mxu0 0.0
    %261 = vmatpush.xpose.msra.mxu0 0.0
    %262 = vmatpush.xpose.msra.mxu0 0.0
    %263 = vmatpush.xpose.msra.mxu0 0.0
    %264 = vmatpush.xpose.msra.mxu0 0.0
    %265 = vmatpush.xpose.msra.mxu0 0.0
    %266 = vmatpush.xpose.msra.mxu0 0.0
    %267 = vmatpush.xpose.msra.mxu0 0.0
    %268 = vmatpush.xpose.msra.mxu0 0.0
    %269 = vmatpush.xpose.msra.mxu0 %v252
    %270 = vmatmul.f32.gmra.mxu0 %v250
    %v271 = vpop.f32.mrf.mxu0
    %v272 = vadd.f32 0.0, %v271
    %273 = vdwg.mxu0
    %v274 = vmul.f32 %v272, 0.35355338
    %v275 = vsel %vm183, %v274, -inf
    %276 = vmax.xlane.f32.xlu0 %v275
    %v277 = vpop.xlane.xlu0 %276
    %v278 = vsub.f32 %v274, %v277
    %v279 = vmul.f32 %v278, 1.442695
    %v280 = vpow.pop %v279
    %v281 = vsel %vm183, %v280, 0.0
    %282 = vadd.xlane.f32.xlu0 %v281
    %v283 = vpop.xlane.xlu0 %282
    %v284 = vrcp.pop %v283
    %v285 = vmul.f32 %v280, %v284
    %287 = vrot.lane.b32.xlu0 %v174, 120
    %v288 = vpop.permute.xlu0 %287
    %v291 = vsel %vm183, %v285, 0
    %293 = vmatpush.msra.mxu0 0.0
    %294 = vmatpush.msra.mxu0 0.0
    %295 = vmatpush.msra.mxu0 0.0
    %296 = vmatpush.msra.mxu0 0.0
    %297 = vmatpush.msra.mxu0 0.0
    %298 = vmatpush.msra.mxu0 0.0
    %299 = vmatpush.msra.mxu0 0.0
    %300 = vmatpush.msra.mxu0 0.0
    %301 = vmatpush.msra.mxu0 0.0
    %302 = vmatpush.msra.mxu0 0.0
    %303 = vmatpush.msra.mxu0 0.0
    %304 = vmatpush.msra.mxu0 0.0
    %305 = vmatpush.msra.mxu0 0.0
    %306 = vmatpush.msra.mxu0 0.0
    %307 = vmatpush.msra.mxu0 0.0
    %308 = vmatpush.msra.mxu0 %v288
    %309 = vmatmul.f32.gmra.mxu0 %v291
    %v310 = vpop.f32.mrf.mxu0
    %v311 = vadd.f32 0.0, %v310
    %312 = vdwg.mxu0
    %v313 = vld [vmem:[%s2 + $0x68] sm:$0xff]
    %v315 = vsel %vm183, %v311, 0
    %317 = vmatpush.msra.mxu0 0.0
    %318 = vmatpush.msra.mxu0 0.0
    %319 = vmatpush.msra.mxu0 0.0
    %320 = vmatpush.msra.mxu0 0.0
    %321 = vmatpush.msra.mxu0 0.0
    %322 = vmatpush.msra.mxu0 0.0
    %323 = vmatpush.msra.mxu0 0.0
    %324 = vmatpush.msra.mxu0 0.0
    %325 = vmatpush.msra.mxu0 0.0
    %326 = vmatpush.msra.mxu0 0.0
    %327 = vmatpush.msra.mxu0 0.0
    %328 = vmatpush.msra.mxu0 0.0
    %329 = vmatpush.msra.mxu0 0.0
    %330 = vmatpush.msra.mxu0 0.0
    %331 = vmatpush.msra.mxu0 0.0
    %332 = vmatpush.msra.mxu0 %v313
    %333 = vmatmul.f32.gmra.mxu0 %v315
    %v334 = vpop.f32.mrf.mxu0
    %v335 = vadd.f32 0.0, %v334
    %336 = vdwg.mxu0
    %v338 = vsel %vm183, %v243, 0
    %340 = vmatpush.msra.mxu0 0.0
    %341 = vmatpush.msra.mxu0 0.0
    %342 = vmatpush.msra.mxu0 0.0
    %343 = vmatpush.msra.mxu0 0.0
    %344 = vmatpush.msra.mxu0 0.0
    %345 = vmatpush.msra.mxu0 0.0
    %346 = vmatpush.msra.mxu0 0.0
    %347 = vmatpush.msra.mxu0 0.0
    %348 = vmatpush.msra.mxu0 0.0
    %349 = vmatpush.msra.mxu0 0.0
    %350 = vmatpush.msra.mxu0 0.0
    %351 = vmatpush.msra.mxu0 0.0
    %352 = vmatpush.msra.mxu0 0.0
    %353 = vmatpush.msra.mxu0 0.0
    %354 = vmatpush.msra.mxu0 0.0
    %355 = vmatpush.msra.mxu0 %v245
    %356 = vmatmul.f32.gmra.mxu0 %v338
    %v357 = vpop.f32.mrf.mxu0
    %v358 = vadd.f32 %v335, %v357
    %359 = vdwg.mxu0
    %360 = vrot.lane.b32.xlu0 %v120, 112
    %v361 = vpop.permute.xlu0 %360
    %362 = vrot.lane.b32.xlu0 %v147, 112
    %v363 = vpop.permute.xlu0 %362
    %v364 = vsel %vm183, %v361, 0
    %v366 = vsel %vm183, %v363, 0
    %368 = vmatpush.xpose.msra.mxu0 0.0
    %369 = vmatpush.xpose.msra.mxu0 0.0
    %370 = vmatpush.xpose.msra.mxu0 0.0
    %371 = vmatpush.xpose.msra.mxu0 0.0
    %372 = vmatpush.xpose.msra.mxu0 0.0
    %373 = vmatpush.xpose.msra.mxu0 0.0
    %374 = vmatpush.xpose.msra.mxu0 0.0
    %375 = vmatpush.xpose.msra.mxu0 0.0
    %376 = vmatpush.xpose.msra.mxu0 0.0
    %377 = vmatpush.xpose.msra.mxu0 0.0
    %378 = vmatpush.xpose.msra.mxu0 0.0
    %379 = vmatpush.xpose.msra.mxu0 0.0
    %380 = vmatpush.xpose.msra.mxu0 0.0
    %381 = vmatpush.xpose.msra.mxu0 0.0
    %382 = vmatpush.xpose.msra.mxu0 0.0
    %383 = vmatpush.xpose.msra.mxu0 %v366
    %384 = vmatmul.f32.gmra.mxu0 %v364
    %v385 = vpop.f32.mrf.mxu0
    %v386 = vadd.f32 0.0, %v385
    %387 = vdwg.mxu0
    %v388 = vmul.f32 %v386, 0.35355338
    %v389 = vsel %vm183, %v388, -inf
    %390 = vmax.xlane.f32.xlu0 %v389
    %v391 = vpop.xlane.xlu0 %390
    %v392 = vsub.f32 %v388, %v391
    %v393 = vmul.f32 %v392, 1.442695
    %v394 = vpow.pop %v393
    %v395 = vsel %vm183, %v394, 0.0
    %396 = vadd.xlane.f32.xlu0 %v395
    %v397 = vpop.xlane.xlu0 %396
    %v398 = vrcp.pop %v397
    %v399 = vmul.f32 %v394, %v398
    %400 = vrot.lane.b32.xlu0 %v174, 112
    %v401 = vpop.permute.xlu0 %400
    %v404 = vsel %vm183, %v399, 0
    %406 = vmatpush.msra.mxu0 0.0
    %407 = vmatpush.msra.mxu0 0.0
    %408 = vmatpush.msra.mxu0 0.0
    %409 = vmatpush.msra.mxu0 0.0
    %410 = vmatpush.msra.mxu0 0.0
    %411 = vmatpush.msra.mxu0 0.0
    %412 = vmatpush.msra.mxu0 0.0
    %413 = vmatpush.msra.mxu0 0.0
    %414 = vmatpush.msra.mxu0 0.0
    %415 = vmatpush.msra.mxu0 0.0
    %416 = vmatpush.msra.mxu0 0.0
    %417 = vmatpush.msra.mxu0 0.0
    %418 = vmatpush.msra.mxu0 0.0
    %419 = vmatpush.msra.mxu0 0.0
    %420 = vmatpush.msra.mxu0 0.0
    %421 = vmatpush.msra.mxu0 %v401
    %422 = vmatmul.f32.gmra.mxu0 %v404
    %v423 = vpop.f32.mrf.mxu0
    %v424 = vadd.f32 0.0, %v423
    %425 = vdwg.mxu0
    %v426 = vld [vmem:[%s2 + $0x70] sm:$0xff]
    %v428 = vsel %vm183, %v424, 0
    %430 = vmatpush.msra.mxu0 0.0
    %431 = vmatpush.msra.mxu0 0.0
    %432 = vmatpush.msra.mxu0 0.0
    %433 = vmatpush.msra.mxu0 0.0
    %434 = vmatpush.msra.mxu0 0.0
    %435 = vmatpush.msra.mxu0 0.0
    %436 = vmatpush.msra.mxu0 0.0
    %437 = vmatpush.msra.mxu0 0.0
    %438 = vmatpush.msra.mxu0 0.0
    %439 = vmatpush.msra.mxu0 0.0
    %440 = vmatpush.msra.mxu0 0.0
    %441 = vmatpush.msra.mxu0 0.0
    %442 = vmatpush.msra.mxu0 0.0
    %443 = vmatpush.msra.mxu0 0.0
    %444 = vmatpush.msra.mxu0 0.0
    %445 = vmatpush.msra.mxu0 %v426
    %446 = vmatmul.f32.gmra.mxu0 %v428
    %v447 = vpop.f32.mrf.mxu0
    %v448 = vadd.f32 0.0, %v447
    %449 = vdwg.mxu0
    %v450 = vadd.f32 %v358, %v448
    %451 = vrot.lane.b32.xlu0 %v120, 104
    %v452 = vpop.permute.xlu0 %451
    %453 = vrot.lane.b32.xlu0 %v147, 104
    %v454 = vpop.permute.xlu0 %453
    %v455 = vsel %vm183, %v452, 0
    %v457 = vsel %vm183, %v454, 0
    %459 = vmatpush.xpose.msra.mxu0 0.0
    %460 = vmatpush.xpose.msra.mxu0 0.0
    %461 = vmatpush.xpose.msra.mxu0 0.0
    %462 = vmatpush.xpose.msra.mxu0 0.0
    %463 = vmatpush.xpose.msra.mxu0 0.0
    %464 = vmatpush.xpose.msra.mxu0 0.0
    %465 = vmatpush.xpose.msra.mxu0 0.0
    %466 = vmatpush.xpose.msra.mxu0 0.0
    %467 = vmatpush.xpose.msra.mxu0 0.0
    %468 = vmatpush.xpose.msra.mxu0 0.0
    %469 = vmatpush.xpose.msra.mxu0 0.0
    %470 = vmatpush.xpose.msra.mxu0 0.0
    %471 = vmatpush.xpose.msra.mxu0 0.0
    %472 = vmatpush.xpose.msra.mxu0 0.0
    %473 = vmatpush.xpose.msra.mxu0 0.0
    %474 = vmatpush.xpose.msra.mxu0 %v457
    %475 = vmatmul.f32.gmra.mxu0 %v455
    %v476 = vpop.f32.mrf.mxu0
    %v477 = vadd.f32 0.0, %v476
    %478 = vdwg.mxu0
    %v479 = vmul.f32 %v477, 0.35355338
    %v480 = vsel %vm183, %v479, -inf
    %481 = vmax.xlane.f32.xlu0 %v480
    %v482 = vpop.xlane.xlu0 %481
    %v483 = vsub.f32 %v479, %v482
    %v484 = vmul.f32 %v483, 1.442695
    %v485 = vpow.pop %v484
    %v486 = vsel %vm183, %v485, 0.0
    %487 = vadd.xlane.f32.xlu0 %v486
    %v488 = vpop.xlane.xlu0 %487
    %v489 = vrcp.pop %v488
    %v490 = vmul.f32 %v485, %v489
    %491 = vrot.lane.b32.xlu0 %v174, 104
    %v492 = vpop.permute.xlu0 %491
    %v495 = vsel %vm183, %v490, 0
    %497 = vmatpush.msra.mxu0 0.0
    %498 = vmatpush.msra.mxu0 0.0
    %499 = vmatpush.msra.mxu0 0.0
    %500 = vmatpush.msra.mxu0 0.0
    %501 = vmatpush.msra.mxu0 0.0
    %502 = vmatpush.msra.mxu0 0.0
    %503 = vmatpush.msra.mxu0 0.0
    %504 = vmatpush.msra.mxu0 0.0
    %505 = vmatpush.msra.mxu0 0.0
    %506 = vmatpush.msra.mxu0 0.0
    %507 = vmatpush.msra.mxu0 0.0
    %508 = vmatpush.msra.mxu0 0.0
    %509 = vmatpush.msra.mxu0 0.0
    %510 = vmatpush.msra.mxu0 0.0
    %511 = vmatpush.msra.mxu0 0.0
    %512 = vmatpush.msra.mxu0 %v492
    %513 = vmatmul.f32.gmra.mxu0 %v495
    %v514 = vpop.f32.mrf.mxu0
    %v515 = vadd.f32 0.0, %v514
    %516 = vdwg.mxu0
    %v517 = vld [vmem:[%s2 + $0x78] sm:$0xff]
    %v519 = vsel %vm183, %v515, 0
    %521 = vmatpush.msra.mxu0 0.0
    %522 = vmatpush.msra.mxu0 0.0
    %523 = vmatpush.msra.mxu0 0.0
    %524 = vmatpush.msra.mxu0 0.0
    %525 = vmatpush.msra.mxu0 0.0
    %526 = vmatpush.msra.mxu0 0.0
    %527 = vmatpush.msra.mxu0 0.0
    %528 = vmatpush.msra.mxu0 0.0
    %529 = vmatpush.msra.mxu0 0.0
    %530 = vmatpush.msra.mxu0 0.0
    %531 = vmatpush.msra.mxu0 0.0
    %532 = vmatpush.msra.mxu0 0.0
    %533 = vmatpush.msra.mxu0 0.0
    %534 = vmatpush.msra.mxu0 0.0
    %535 = vmatpush.msra.mxu0 0.0
    %536 = vmatpush.msra.mxu0 %v517
    %537 = vmatmul.f32.gmra.mxu0 %v519
    %v538 = vpop.f32.mrf.mxu0
    %v539 = vadd.f32 0.0, %v538
    %540 = vdwg.mxu0
    %v541 = vadd.f32 %v450, %v539
    %v543 = vsel %vm183, %v123, 0
    %v546 = vsel %vm183, %v150, 0
    %548 = vmatpush.xpose.msra.mxu0 0.0
    %549 = vmatpush.xpose.msra.mxu0 0.0
    %550 = vmatpush.xpose.msra.mxu0 0.0
    %551 = vmatpush.xpose.msra.mxu0 0.0
    %552 = vmatpush.xpose.msra.mxu0 0.0
    %553 = vmatpush.xpose.msra.mxu0 0.0
    %554 = vmatpush.xpose.msra.mxu0 0.0
    %555 = vmatpush.xpose.msra.mxu0 0.0
    %556 = vmatpush.xpose.msra.mxu0 0.0
    %557 = vmatpush.xpose.msra.mxu0 0.0
    %558 = vmatpush.xpose.msra.mxu0 0.0
    %559 = vmatpush.xpose.msra.mxu0 0.0
    %560 = vmatpush.xpose.msra.mxu0 0.0
    %561 = vmatpush.xpose.msra.mxu0 0.0
    %562 = vmatpush.xpose.msra.mxu0 0.0
    %563 = vmatpush.xpose.msra.mxu0 %v546
    %564 = vmatmul.f32.gmra.mxu0 %v543
    %v565 = vpop.f32.mrf.mxu0
    %v566 = vadd.f32 0.0, %v565
    %567 = vdwg.mxu0
    %v568 = vmul.f32 %v566, 0.35355338
    %v569 = vsel %vm183, %v568, -inf
    %570 = vmax.xlane.f32.xlu0 %v569
    %v571 = vpop.xlane.xlu0 %570
    %v572 = vsub.f32 %v568, %v571
    %v573 = vmul.f32 %v572, 1.442695
    %v574 = vpow.pop %v573
    %v575 = vsel %vm183, %v574, 0.0
    %576 = vadd.xlane.f32.xlu0 %v575
    %v577 = vpop.xlane.xlu0 %576
    %v578 = vrcp.pop %v577
    %v579 = vmul.f32 %v574, %v578
    %v581 = vsel %vm183, %v579, 0
    %583 = vmatpush.msra.mxu0 0.0
    %584 = vmatpush.msra.mxu0 0.0
    %585 = vmatpush.msra.mxu0 0.0
    %586 = vmatpush.msra.mxu0 0.0
    %587 = vmatpush.msra.mxu0 0.0
    %588 = vmatpush.msra.mxu0 0.0
    %589 = vmatpush.msra.mxu0 0.0
    %590 = vmatpush.msra.mxu0 0.0
    %591 = vmatpush.msra.mxu0 0.0
    %592 = vmatpush.msra.mxu0 0.0
    %593 = vmatpush.msra.mxu0 0.0
    %594 = vmatpush.msra.mxu0 0.0
    %595 = vmatpush.msra.mxu0 0.0
    %596 = vmatpush.msra.mxu0 0.0
    %597 = vmatpush.msra.mxu0 0.0
    %598 = vmatpush.msra.mxu0 %v177
    %599 = vmatmul.f32.gmra.mxu0 %v581
    %v600 = vpop.f32.mrf.mxu0
    %v601 = vadd.f32 0.0, %v600
    %602 = vdwg.mxu0
    %603 = vrot.lane.b32.xlu0 %v123, 120
    %v604 = vpop.permute.xlu0 %603
    %605 = vrot.lane.b32.xlu0 %v150, 120
    %v606 = vpop.permute.xlu0 %605
    %v607 = vsel %vm183, %v604, 0
    %v609 = vsel %vm183, %v606, 0
    %611 = vmatpush.xpose.msra.mxu0 0.0
    %612 = vmatpush.xpose.msra.mxu0 0.0
    %613 = vmatpush.xpose.msra.mxu0 0.0
    %614 = vmatpush.xpose.msra.mxu0 0.0
    %615 = vmatpush.xpose.msra.mxu0 0.0
    %616 = vmatpush.xpose.msra.mxu0 0.0
    %617 = vmatpush.xpose.msra.mxu0 0.0
    %618 = vmatpush.xpose.msra.mxu0 0.0
    %619 = vmatpush.xpose.msra.mxu0 0.0
    %620 = vmatpush.xpose.msra.mxu0 0.0
    %621 = vmatpush.xpose.msra.mxu0 0.0
    %622 = vmatpush.xpose.msra.mxu0 0.0
    %623 = vmatpush.xpose.msra.mxu0 0.0
    %624 = vmatpush.xpose.msra.mxu0 0.0
    %625 = vmatpush.xpose.msra.mxu0 0.0
    %626 = vmatpush.xpose.msra.mxu0 %v609
    %627 = vmatmul.f32.gmra.mxu0 %v607
    %v628 = vpop.f32.mrf.mxu0
    %v629 = vadd.f32 0.0, %v628
    %630 = vdwg.mxu0
    %v631 = vmul.f32 %v629, 0.35355338
    %v632 = vsel %vm183, %v631, -inf
    %633 = vmax.xlane.f32.xlu0 %v632
    %v634 = vpop.xlane.xlu0 %633
    %v635 = vsub.f32 %v631, %v634
    %v636 = vmul.f32 %v635, 1.442695
    %v637 = vpow.pop %v636
    %v638 = vsel %vm183, %v637, 0.0
    %639 = vadd.xlane.f32.xlu0 %v638
    %v640 = vpop.xlane.xlu0 %639
    %v641 = vrcp.pop %v640
    %v642 = vmul.f32 %v637, %v641
    %644 = vrot.lane.b32.xlu0 %v177, 120
    %v645 = vpop.permute.xlu0 %644
    %v648 = vsel %vm183, %v642, 0
    %650 = vmatpush.msra.mxu0 0.0
    %651 = vmatpush.msra.mxu0 0.0
    %652 = vmatpush.msra.mxu0 0.0
    %653 = vmatpush.msra.mxu0 0.0
    %654 = vmatpush.msra.mxu0 0.0
    %655 = vmatpush.msra.mxu0 0.0
    %656 = vmatpush.msra.mxu0 0.0
    %657 = vmatpush.msra.mxu0 0.0
    %658 = vmatpush.msra.mxu0 0.0
    %659 = vmatpush.msra.mxu0 0.0
    %660 = vmatpush.msra.mxu0 0.0
    %661 = vmatpush.msra.mxu0 0.0
    %662 = vmatpush.msra.mxu0 0.0
    %663 = vmatpush.msra.mxu0 0.0
    %664 = vmatpush.msra.mxu0 0.0
    %665 = vmatpush.msra.mxu0 %v645
    %666 = vmatmul.f32.gmra.mxu0 %v648
    %v667 = vpop.f32.mrf.mxu0
    %v668 = vadd.f32 0.0, %v667
    %669 = vdwg.mxu0
    %v671 = vsel %vm183, %v668, 0
    %673 = vmatpush.msra.mxu0 0.0
    %674 = vmatpush.msra.mxu0 0.0
    %675 = vmatpush.msra.mxu0 0.0
    %676 = vmatpush.msra.mxu0 0.0
    %677 = vmatpush.msra.mxu0 0.0
    %678 = vmatpush.msra.mxu0 0.0
    %679 = vmatpush.msra.mxu0 0.0
    %680 = vmatpush.msra.mxu0 0.0
    %681 = vmatpush.msra.mxu0 0.0
    %682 = vmatpush.msra.mxu0 0.0
    %683 = vmatpush.msra.mxu0 0.0
    %684 = vmatpush.msra.mxu0 0.0
    %685 = vmatpush.msra.mxu0 0.0
    %686 = vmatpush.msra.mxu0 0.0
    %687 = vmatpush.msra.mxu0 0.0
    %688 = vmatpush.msra.mxu0 %v313
    %689 = vmatmul.f32.gmra.mxu0 %v671
    %v690 = vpop.f32.mrf.mxu0
    %v691 = vadd.f32 0.0, %v690
    %692 = vdwg.mxu0
    %v694 = vsel %vm183, %v601, 0
    %696 = vmatpush.msra.mxu0 0.0
    %697 = vmatpush.msra.mxu0 0.0
    %698 = vmatpush.msra.mxu0 0.0
    %699 = vmatpush.msra.mxu0 0.0
    %700 = vmatpush.msra.mxu0 0.0
    %701 = vmatpush.msra.mxu0 0.0
    %702 = vmatpush.msra.mxu0 0.0
    %703 = vmatpush.msra.mxu0 0.0
    %704 = vmatpush.msra.mxu0 0.0
    %705 = vmatpush.msra.mxu0 0.0
    %706 = vmatpush.msra.mxu0 0.0
    %707 = vmatpush.msra.mxu0 0.0
    %708 = vmatpush.msra.mxu0 0.0
    %709 = vmatpush.msra.mxu0 0.0
    %710 = vmatpush.msra.mxu0 0.0
    %711 = vmatpush.msra.mxu0 %v245
    %712 = vmatmul.f32.gmra.mxu0 %v694
    %v713 = vpop.f32.mrf.mxu0
    %v714 = vadd.f32 %v691, %v713
    %715 = vdwg.mxu0
    %716 = vrot.lane.b32.xlu0 %v123, 112
    %v717 = vpop.permute.xlu0 %716
    %718 = vrot.lane.b32.xlu0 %v150, 112
    %v719 = vpop.permute.xlu0 %718
    %v720 = vsel %vm183, %v717, 0
    %v722 = vsel %vm183, %v719, 0
    %724 = vmatpush.xpose.msra.mxu0 0.0
    %725 = vmatpush.xpose.msra.mxu0 0.0
    %726 = vmatpush.xpose.msra.mxu0 0.0
    %727 = vmatpush.xpose.msra.mxu0 0.0
    %728 = vmatpush.xpose.msra.mxu0 0.0
    %729 = vmatpush.xpose.msra.mxu0 0.0
    %730 = vmatpush.xpose.msra.mxu0 0.0
    %731 = vmatpush.xpose.msra.mxu0 0.0
    %732 = vmatpush.xpose.msra.mxu0 0.0
    %733 = vmatpush.xpose.msra.mxu0 0.0
    %734 = vmatpush.xpose.msra.mxu0 0.0
    %735 = vmatpush.xpose.msra.mxu0 0.0
    %736 = vmatpush.xpose.msra.mxu0 0.0
    %737 = vmatpush.xpose.msra.mxu0 0.0
    %738 = vmatpush.xpose.msra.mxu0 0.0
    %739 = vmatpush.xpose.msra.mxu0 %v722
    %740 = vmatmul.f32.gmra.mxu0 %v720
    %v741 = vpop.f32.mrf.mxu0
    %v742 = vadd.f32 0.0, %v741
    %743 = vdwg.mxu0
    %v744 = vmul.f32 %v742, 0.35355338
    %v745 = vsel %vm183, %v744, -inf
    %746 = vmax.xlane.f32.xlu0 %v745
    %v747 = vpop.xlane.xlu0 %746
    %v748 = vsub.f32 %v744, %v747
    %v749 = vmul.f32 %v748, 1.442695
    %v750 = vpow.pop %v749
    %v751 = vsel %vm183, %v750, 0.0
    %752 = vadd.xlane.f32.xlu0 %v751
    %v753 = vpop.xlane.xlu0 %752
    %v754 = vrcp.pop %v753
    %v755 = vmul.f32 %v750, %v754
    %756 = vrot.lane.b32.xlu0 %v177, 112
    %v757 = vpop.permute.xlu0 %756
    %v760 = vsel %vm183, %v755, 0
    %762 = vmatpush.msra.mxu0 0.0
    %763 = vmatpush.msra.mxu0 0.0
    %764 = vmatpush.msra.mxu0 0.0
    %765 = vmatpush.msra.mxu0 0.0
    %766 = vmatpush.msra.mxu0 0.0
    %767 = vmatpush.msra.mxu0 0.0
    %768 = vmatpush.msra.mxu0 0.0
    %769 = vmatpush.msra.mxu0 0.0
    %770 = vmatpush.msra.mxu0 0.0
    %771 = vmatpush.msra.mxu0 0.0
    %772 = vmatpush.msra.mxu0 0.0
    %773 = vmatpush.msra.mxu0 0.0
    %774 = vmatpush.msra.mxu0 0.0
    %775 = vmatpush.msra.mxu0 0.0
    %776 = vmatpush.msra.mxu0 0.0
    %777 = vmatpush.msra.mxu0 %v757
    %778 = vmatmul.f32.gmra.mxu0 %v760
    %v779 = vpop.f32.mrf.mxu0
    %v780 = vadd.f32 0.0, %v779
    %781 = vdwg.mxu0
    %v783 = vsel %vm183, %v780, 0
    %785 = vmatpush.msra.mxu0 0.0
    %786 = vmatpush.msra.mxu0 0.0
    %787 = vmatpush.msra.mxu0 0.0
    %788 = vmatpush.msra.mxu0 0.0
    %789 = vmatpush.msra.mxu0 0.0
    %790 = vmatpush.msra.mxu0 0.0
    %791 = vmatpush.msra.mxu0 0.0
    %792 = vmatpush.msra.mxu0 0.0
    %793 = vmatpush.msra.mxu0 0.0
    %794 = vmatpush.msra.mxu0 0.0
    %795 = vmatpush.msra.mxu0 0.0
    %796 = vmatpush.msra.mxu0 0.0
    %797 = vmatpush.msra.mxu0 0.0
    %798 = vmatpush.msra.mxu0 0.0
    %799 = vmatpush.msra.mxu0 0.0
    %800 = vmatpush.msra.mxu0 %v426
    %801 = vmatmul.f32.gmra.mxu0 %v783
    %v802 = vpop.f32.mrf.mxu0
    %v803 = vadd.f32 0.0, %v802
    %804 = vdwg.mxu0
    %v805 = vadd.f32 %v714, %v803
    %806 = vrot.lane.b32.xlu0 %v123, 104
    %v807 = vpop.permute.xlu0 %806
    %808 = vrot.lane.b32.xlu0 %v150, 104
    %v809 = vpop.permute.xlu0 %808
    %v810 = vsel %vm183, %v807, 0
    %v812 = vsel %vm183, %v809, 0
    %814 = vmatpush.xpose.msra.mxu0 0.0
    %815 = vmatpush.xpose.msra.mxu0 0.0
    %816 = vmatpush.xpose.msra.mxu0 0.0
    %817 = vmatpush.xpose.msra.mxu0 0.0
    %818 = vmatpush.xpose.msra.mxu0 0.0
    %819 = vmatpush.xpose.msra.mxu0 0.0
    %820 = vmatpush.xpose.msra.mxu0 0.0
    %821 = vmatpush.xpose.msra.mxu0 0.0
    %822 = vmatpush.xpose.msra.mxu0 0.0
    %823 = vmatpush.xpose.msra.mxu0 0.0
    %824 = vmatpush.xpose.msra.mxu0 0.0
    %825 = vmatpush.xpose.msra.mxu0 0.0
    %826 = vmatpush.xpose.msra.mxu0 0.0
    %827 = vmatpush.xpose.msra.mxu0 0.0
    %828 = vmatpush.xpose.msra.mxu0 0.0
    %829 = vmatpush.xpose.msra.mxu0 %v812
    %830 = vmatmul.f32.gmra.mxu0 %v810
    %v831 = vpop.f32.mrf.mxu0
    %v832 = vadd.f32 0.0, %v831
    %833 = vdwg.mxu0
    %v834 = vmul.f32 %v832, 0.35355338
    %v835 = vsel %vm183, %v834, -inf
    %836 = vmax.xlane.f32.xlu0 %v835
    %v837 = vpop.xlane.xlu0 %836
    %v838 = vsub.f32 %v834, %v837
    %v839 = vmul.f32 %v838, 1.442695
    %v840 = vpow.pop %v839
    %v841 = vsel %vm183, %v840, 0.0
    %842 = vadd.xlane.f32.xlu0 %v841
    %v843 = vpop.xlane.xlu0 %842
    %v844 = vrcp.pop %v843
    %v845 = vmul.f32 %v840, %v844
    %846 = vrot.lane.b32.xlu0 %v177, 104
    %v847 = vpop.permute.xlu0 %846
    %v850 = vsel %vm183, %v845, 0
    %852 = vmatpush.msra.mxu0 0.0
    %853 = vmatpush.msra.mxu0 0.0
    %854 = vmatpush.msra.mxu0 0.0
    %855 = vmatpush.msra.mxu0 0.0
    %856 = vmatpush.msra.mxu0 0.0
    %857 = vmatpush.msra.mxu0 0.0
    %858 = vmatpush.msra.mxu0 0.0
    %859 = vmatpush.msra.mxu0 0.0
    %860 = vmatpush.msra.mxu0 0.0
    %861 = vmatpush.msra.mxu0 0.0
    %862 = vmatpush.msra.mxu0 0.0
    %863 = vmatpush.msra.mxu0 0.0
    %864 = vmatpush.msra.mxu0 0.0
    %865 = vmatpush.msra.mxu0 0.0
    %866 = vmatpush.msra.mxu0 0.0
    %867 = vmatpush.msra.mxu0 %v847
    %868 = vmatmul.f32.gmra.mxu0 %v850
    %v869 = vpop.f32.mrf.mxu0
    %v870 = vadd.f32 0.0, %v869
    %871 = vdwg.mxu0
    %v873 = vsel %vm183, %v870, 0
    %875 = vmatpush.msra.mxu0 0.0
    %876 = vmatpush.msra.mxu0 0.0
    %877 = vmatpush.msra.mxu0 0.0
    %878 = vmatpush.msra.mxu0 0.0
    %879 = vmatpush.msra.mxu0 0.0
    %880 = vmatpush.msra.mxu0 0.0
    %881 = vmatpush.msra.mxu0 0.0
    %882 = vmatpush.msra.mxu0 0.0
    %883 = vmatpush.msra.mxu0 0.0
    %884 = vmatpush.msra.mxu0 0.0
    %885 = vmatpush.msra.mxu0 0.0
    %886 = vmatpush.msra.mxu0 0.0
    %887 = vmatpush.msra.mxu0 0.0
    %888 = vmatpush.msra.mxu0 0.0
    %889 = vmatpush.msra.mxu0 0.0
    %890 = vmatpush.msra.mxu0 %v517
    %891 = vmatmul.f32.gmra.mxu0 %v873
    %v892 = vpop.f32.mrf.mxu0
    %v893 = vadd.f32 0.0, %v892
    %894 = vdwg.mxu0
    %v895 = vadd.f32 %v805, %v893
    %v896 = vperm.slane %v29, 0
    %v897 = vadd.f32 %v541, %v896
    %v898 = vadd.f32 %v895, %v896
    %v899 = vadd.f32 %v897, %v897
    %v900 = vadd.f32 %v898, %v898
    %v901 = vsel %vm34, %v899, 0.0
    %902 = vadd.xlane.f32.xlu0 %v901
    %v903 = vpop.xlane.xlu0 %902
    %v904 = vsel %vm34, %v900, 0.0
    %905 = vadd.xlane.f32.xlu0 %v904
    %v906 = vpop.xlane.xlu0 %905
    %v907 = vmul.f32 %v903, %v47
    %v908 = vmul.f32 %v906, %v47
    %v909 = vsub.f32 %v899, %v907
    %v910 = vsub.f32 %v900, %v908
    %v911 = vmul.f32 %v909, %v909
    %v912 = vmul.f32 %v910, %v910
    %v913 = vsel %vm34, %v911, 0.0
    %914 = vadd.xlane.f32.xlu0 %v913
    %v915 = vpop.xlane.xlu0 %914
    %v916 = vsel %vm34, %v912, 0.0
    %917 = vadd.xlane.f32.xlu0 %v916
    %v918 = vpop.xlane.xlu0 %917
    %v919 = vmul.f32 %v915, %v47
    %v920 = vmul.f32 %v918, %v47
    %v921 = vadd.f32 %v919, 1e-05
    %v922 = vadd.f32 %v920, 1e-05
    %v923 = vrsqrt.pop %v921
    %v924 = vmul.f32 %v923, %v921
    %v925 = vmul.f32 %v924, %v923
    %v926 = vmul.f32 0.5, %v925
    %v927 = vsub.f32 1.5, %v926
    %v928 = vmul.f32 %v923, %v927
    %vm929 = vweird.f32 %v921
    %vm930 = vweird.f32 %v923
    %vm931 = vmor %vm929, %vm930
    %v932 = vsel %vm931, %v923, %v928
    %v933 = vrsqrt.pop %v922
    %v934 = vmul.f32 %v933, %v922
    %v935 = vmul.f32 %v934, %v933
    %v936 = vmul.f32 0.5, %v935
    %v937 = vsub.f32 1.5, %v936
    %v938 = vmul.f32 %v933, %v937
    %vm939 = vweird.f32 %v922
    %vm940 = vweird.f32 %v933
    %vm941 = vmor %vm939, %vm940
    %v942 = vsel %vm941, %v933, %v938
    %v943 = vmul.f32 %v909, %v932
    %v944 = vmul.f32 %v910, %v942
    %v945 = vperm.slane %v30, 0
    %v946 = vmul.f32 %v943, %v945
    %v947 = vmul.f32 %v944, %v945
    %v948 = vperm.slane %v31, 0
    %v949 = vadd.f32 %v946, %v948
    %v950 = vadd.f32 %v947, %v948
    %v951 = vld [vmem:[%s3] sm:$0xff]
    %v952 = vld [vmem:[%s3 + $0x8] sm:$0xff]
    %v953 = vld [vmem:[%s3 + $0x10] sm:$0xff]
    %v954 = vld [vmem:[%s3 + $0x18] sm:$0xff]
    %v955 = vperm.slane %v33, 0
    %v957 = vsel %vm34, %v949, 0
    %v960 = vsel %vm34, %v950, 0
    %962 = vmatpush.msra.mxu0 0.0
    %963 = vmatpush.msra.mxu0 0.0
    %964 = vmatpush.msra.mxu0 0.0
    %965 = vmatpush.msra.mxu0 0.0
    %966 = vmatpush.msra.mxu0 0.0
    %967 = vmatpush.msra.mxu0 0.0
    %968 = vmatpush.msra.mxu0 0.0
    %969 = vmatpush.msra.mxu0 0.0
    %970 = vmatpush.msra.mxu0 0.0
    %971 = vmatpush.msra.mxu0 0.0
    %972 = vmatpush.msra.mxu0 0.0
    %973 = vmatpush.msra.mxu0 0.0
    %974 = vmatpush.msra.mxu0 %v954
    %975 = vmatpush.msra.mxu0 %v953
    %976 = vmatpush.msra.mxu0 %v952
    %977 = vmatpush.msra.mxu0 %v951
    %978 = vmatmul.f32.gmra.mxu0 %v957
    %v979 = vpop.f32.mrf.mxu0
    %v980 = vadd.f32 %v955, %v979
    %981 = vmatmul.f32.gmra.mxu0 %v960
    %v982 = vpop.f32.mrf.mxu0
    %v983 = vadd.f32 %v955, %v982
    %984 = vdwg.mxu0
    %v985 = vmul.f32 %v980, 0.5
    %v986 = vmul.f32 %v983, 0.5
    %v987 = vmul.f32 %v980, 0.70710677
    %v988 = vmul.f32 %v983, 0.70710677
    %v989 = vmul.f32 %v987, %v987
    %v990 = vmin.f32 16.0, %v989
    %v991 = vmul.f32 %v990, 2.1237322e-06
    %v992 = vadd.f32 %v991, 0.00028619796
    %v993 = vmul.f32 %v990, %v992
    %v994 = vadd.f32 %v993, 0.0036580483
    %v995 = vmul.f32 %v990, %v994
    %v996 = vadd.f32 %v995, 0.05243302
    %v997 = vmul.f32 %v990, %v996
    %v998 = vadd.f32 %v997, 0.18741608
    %v999 = vmul.f32 %v990, %v998
    %v1000 = vadd.f32 %v999, 1.1283791
    %v1001 = vmul.f32 %v987, %v1000
    %v1002 = vmul.f32 %v990, 3.8918573e-05
    %v1003 = vadd.f32 %v1002, 0.001143296
    %v1004 = vmul.f32 %v990, %v1003
    %v1005 = vadd.f32 %v1004, 0.014752088
    %v1006 = vmul.f32 %v990, %v1005
    %v1007 = vadd.f32 %v1006, 0.112945676
    %v1008 = vmul.f32 %v990, %v1007
    %v1009 = vadd.f32 %v1008, 0.4994258
    %v1010 = vmul.f32 %v990, %v1009
    %v1011 = vadd.f32 %v1010, 1.0
    %v1012 = vrcp.pop %v1011
    %v1013 = vmul.f32 %v1011, %v1012
    %v1014 = vsub.f32 1.0, %v1013
    %v1015 = vmul.f32 %v1012, %v1014
    %v1016 = vadd.f32 %v1012, %v1015
    %vm1017 = vweird.f32 %v1011
    %vm1018 = vweird.f32 %v1012
    %vm1019 = vmor %vm1017, %vm1018
    %v1020 = vsel %vm1019, %v1012, %v1016
    %v1021 = vand.u32 2147483647, %v1011
    %vm1022 = vcmp.eq.f32.partialorder %v1021, 8.507059e+37
    %v1023 = vand.u32 %v1011, 2147483648
    %v1024 = vor.u32 1.1754944e-38, %v1023
    %v1025 = vsel %vm1022, %v1024, %v1020
    %v1026 = vmul.f32 %v1001, %v1025
    %v1027 = vmin.f32 %v1026, 1.0
    %v1028 = vmax.f32 %v1027, -1.0
    %v1029 = vmul.f32 %v988, %v988
    %v1030 = vmin.f32 16.0, %v1029
    %v1031 = vmul.f32 %v1030, 2.1237322e-06
    %v1032 = vadd.f32 %v1031, 0.00028619796
    %v1033 = vmul.f32 %v1030, %v1032
    %v1034 = vadd.f32 %v1033, 0.0036580483
    %v1035 = vmul.f32 %v1030, %v1034
    %v1036 = vadd.f32 %v1035, 0.05243302
    %v1037 = vmul.f32 %v1030, %v1036
    %v1038 = vadd.f32 %v1037, 0.18741608
    %v1039 = vmul.f32 %v1030, %v1038
    %v1040 = vadd.f32 %v1039, 1.1283791
    %v1041 = vmul.f32 %v988, %v1040
    %v1042 = vmul.f32 %v1030, 3.8918573e-05
    %v1043 = vadd.f32 %v1042, 0.001143296
    %v1044 = vmul.f32 %v1030, %v1043
    %v1045 = vadd.f32 %v1044, 0.014752088
    %v1046 = vmul.f32 %v1030, %v1045
    %v1047 = vadd.f32 %v1046, 0.112945676
    %v1048 = vmul.f32 %v1030, %v1047
    %v1049 = vadd.f32 %v1048, 0.4994258
    %v1050 = vmul.f32 %v1030, %v1049
    %v1051 = vadd.f32 %v1050, 1.0
    %v1052 = vrcp.pop %v1051
    %v1053 = vmul.f32 %v1051, %v1052
    %v1054 = vsub.f32 1.0, %v1053
    %v1055 = vmul.f32 %v1052, %v1054
    %v1056 = vadd.f32 %v1052, %v1055
    %vm1057 = vweird.f32 %v1051
    %vm1058 = vweird.f32 %v1052
    %vm1059 = vmor %vm1057, %vm1058
    %v1060 = vsel %vm1059, %v1052, %v1056
    %v1061 = vand.u32 2147483647, %v1051
    %vm1062 = vcmp.eq.f32.partialorder %v1061, 8.507059e+37
    %v1063 = vand.u32 %v1051, 2147483648
    %v1064 = vor.u32 1.1754944e-38, %v1063
    %v1065 = vsel %vm1062, %v1064, %v1060
    %v1066 = vmul.f32 %v1041, %v1065
    %v1067 = vmin.f32 %v1066, 1.0
    %v1068 = vmax.f32 %v1067, -1.0
    %v1069 = vadd.f32 %v1028, 1.0
    %v1070 = vadd.f32 %v1068, 1.0
    %v1071 = vmul.f32 %v985, %v1069
    %v1072 = vmul.f32 %v986, %v1070
    %v1073 = vld [vmem:[%s4] sm:$0xff]
    %v1074 = vld [vmem:[%s4 + $0x8] sm:$0xff]
    %v1075 = vld [vmem:[%s4 + $0x10] sm:$0xff]
    %v1076 = vld [vmem:[%s4 + $0x18] sm:$0xff]
    %v1077 = vld [vmem:[%s4 + $0x20] sm:$0xff]
    %v1078 = vld [vmem:[%s4 + $0x28] sm:$0xff]
    %v1079 = vld [vmem:[%s4 + $0x30] sm:$0xff]
    %v1080 = vld [vmem:[%s4 + $0x38] sm:$0xff]
    %v1081 = vld [vmem:[%s4 + $0x40] sm:$0xff]
    %v1082 = vld [vmem:[%s4 + $0x48] sm:$0xff]
    %v1083 = vld [vmem:[%s4 + $0x50] sm:$0xff]
    %v1084 = vld [vmem:[%s4 + $0x58] sm:$0xff]
    %v1085 = vld [vmem:[%s4 + $0x60] sm:$0xff]
    %v1086 = vld [vmem:[%s4 + $0x68] sm:$0xff]
    %v1087 = vld [vmem:[%s4 + $0x70] sm:$0xff]
    %v1088 = vld [vmem:[%s4 + $0x78] sm:$0xff]
    %v1089 = vperm.slane %v32, 0
    %1090 = vmatpush.msra.mxu0 %v1088
    %1091 = vmatpush.msra.mxu0 %v1087
    %1092 = vmatpush.msra.mxu0 %v1086
    %1093 = vmatpush.msra.mxu0 %v1085
    %1094 = vmatpush.msra.mxu0 %v1084
    %1095 = vmatpush.msra.mxu0 %v1083
    %1096 = vmatpush.msra.mxu0 %v1082
    %1097 = vmatpush.msra.mxu0 %v1081
    %1098 = vmatpush.msra.mxu0 %v1080
    %1099 = vmatpush.msra.mxu0 %v1079
    %1100 = vmatpush.msra.mxu0 %v1078
    %1101 = vmatpush.msra.mxu0 %v1077
    %1102 = vmatpush.msra.mxu0 %v1076
    %1103 = vmatpush.msra.mxu0 %v1075
    %1104 = vmatpush.msra.mxu0 %v1074
    %1105 = vmatpush.msra.mxu0 %v1073
    %1106 = vmatmul.f32.gmra.mxu0 %v1071
    %v1107 = vpop.f32.mrf.mxu0
    %v1108 = vadd.f32 %v1089, %v1107
    %1109 = vmatmul.f32.gmra.mxu0 %v1072
    %v1110 = vpop.f32.mrf.mxu0
    %v1111 = vadd.f32 %v1089, %v1110
    %1112 = vdwg.mxu0
    %v1113 = vadd.f32 %v899, %v1108
    %v1114 = vadd.f32 %v900, %v1111
    %1115 = vst.msk [vmem:[#allocation2] sm:$0xff] %vm34, %v1113
    %1116 = vst.msk [vmem:[#allocation2 + $0x8] sm:$0xff] %vm34, %v1114
    // Predicated region
    $region22: #{tpu_custom_call.1} parent=1 // pred_check
      _
    $region23: #{tpu_custom_call.1} parent=1 // pred_check_branch
      %1118 = sbr.rel (0) target = $region25
    $region24: #{tpu_custom_call.1} parent=1 // pred_region
      %1120 = vsyncadd [#allocation3], 0
      %s1121 = sshll.u32 [#allocation2], 4
      %s1122 = int_to_ptr.vmem [resolvable:$true] %s1121
      %s1123 = sshll.u32 %s5, 4
      %s1124 = int_to_ptr.hbm [resolvable:$true] %s1123
      %1129 = dma.vmem_to_hbm [thread:$0]  %s1122, 256, %s1124, [#allocation3], 128, 128, 8
    $region25: #{tpu_custom_call.1} parent=1 // pred_fallthru
      _
    // Predicated region
    $region26: #{tpu_custom_call.1} parent=1 // pred_check
      _
    $region27: #{tpu_custom_call.1} parent=1 // pred_check_branch
      %1131 = sbr.rel (0) target = $region29
    $region28: #{tpu_custom_call.1} parent=1 // pred_region
      %1133 = vsyncadd [#allocation5], 0
      %s1134 = sshll.u32 [#allocation4], 4
      %s1135 = int_to_ptr.vmem [resolvable:$true] %s1134
      %s1136 = sshll.u32 %s6, 4
      %s1137 = int_to_ptr.hbm [resolvable:$true] %s1136
      %1142 = dma.vmem_to_hbm [thread:$0]  %s1135, 256, %s1137, [#allocation5], 128, 128, 8
    $region29: #{tpu_custom_call.1} parent=1 // pred_fallthru
      _
    // Predicated region
    $region30: #{tpu_custom_call.1} parent=1 // pred_check
      _
    $region31: #{tpu_custom_call.1} parent=1 // pred_check_branch
      %1144 = sbr.rel (0) target = $region33
    $region32: #{tpu_custom_call.1} parent=1 // pred_region
      %1146 = vsyncadd [#allocation5], 0
      %s1147 = sshll.u32 [#allocation6], 4
      %s1148 = int_to_ptr.vmem [resolvable:$true] %s1147
      %s1149 = sshll.u32 %s7, 4
      %s1150 = int_to_ptr.hbm [resolvable:$true] %s1149
      %1155 = dma.vmem_to_hbm [thread:$0]  %s1148, 256, %s1150, [#allocation5], 128, 128, 8
    $region33: #{tpu_custom_call.1} parent=1 // pred_fallthru
      _
    // Predicated region
    $region34: #{tpu_custom_call.1} parent=1 // pred_check
      _
    $region35: #{tpu_custom_call.1} parent=1 // pred_check_branch
      %1157 = sbr.rel (0) target = $region37
    $region36: #{tpu_custom_call.1} parent=1 // pred_region
      %1159 = dma.done [#allocation3], 256
    $region37: #{tpu_custom_call.1} parent=1 // pred_fallthru
      _
    // Predicated region
    $region38: #{tpu_custom_call.1} parent=1 // pred_check
      _
    $region39: #{tpu_custom_call.1} parent=1 // pred_check_branch
      %1161 = sbr.rel (0) target = $region41
    $region40: #{tpu_custom_call.1} parent=1 // pred_region
      %1163 = dma.done [#allocation5], 256
    $region41: #{tpu_custom_call.1} parent=1 // pred_fallthru
      _
    // Predicated region
    $region42: #{tpu_custom_call.1} parent=1 // pred_check
      _
    $region43: #{tpu_custom_call.1} parent=1 // pred_check_branch
      %1165 = sbr.rel (0) target = $region45
    $region44: #{tpu_custom_call.1} parent=1 // pred_region
      %1167 = dma.done [#allocation5], 256
    $region45: #{tpu_custom_call.1} parent=1 // pred_fallthru
      _
    %1168 = vsyncpa [#allocation3], 1
    %1169 = vsyncpa [#allocation5], 1

</llo_original>
